<compile_context>
chip_gen: v5e
topology: v5e:2x2
jax: 0.10.0
libtpu: 0.0.40
codegen_flags: <defaults>
</compile_context>

<pallas_src>
import functools
import math

import numpy as np

import jax
import jax.numpy as jnp
from jax.experimental import pallas as pl
from jax.experimental.pallas import tpu as pltpu


# ---------------------------------------------------------------------------
# in-kernel helpers
# ---------------------------------------------------------------------------
def _matmul(a, w):
    """a @ w with a degenerate-K fallback (contraction dim 1 -> broadcast mul)."""
    if a.shape[1] == 1:
        return a * w[0:1, :]
    return jnp.dot(a, w, preferred_element_type=jnp.float32)


def _leaky_relu(x, slope=0.2):
    # The reference decoder uses negative_slope=0.2 after every Linear,
    # including the final one (FDRNet._build_decoder).
    return jnp.where(x >= 0.0, x, slope * x)


def _causal_conv(x, w_ref, b_ref, *, K, dil, Cout, bd_ref=None):
    """Causal dilated Conv1d + Chomp1d as ONE matmul + shifted-tap accumulation.

    x:      (B, L, Cin) value (time on sublanes, channels on lanes).
    w_ref:  (Cin, K*Cout [+ Cout]) VMEM ref; column block k holds PyTorch tap k
            weights (w_torch[:, :, k].T); the optional trailing Cout columns hold
            the folded 1x1 downsample weights.
    b_ref:  (1, Cout) conv bias; bd_ref: (1, Cout) downsample bias (if folded).

    Returns (conv_out (B, L, Cout) pre-ReLU, downsample_out (B, L, Cout) | None).
    No VMEM staging: the causal shift of tap k by s = (K-1-k)*dil is a per-batch
    zero-block sublane concat on values; taps with s >= L contribute only padding
    and are statically skipped.
    """
    B, L, Cin = x.shape
    cols = w_ref.shape[1]
    z = _matmul(x.reshape(B * L, Cin), w_ref[...])            # (B*L, cols)

    # tap K-1 has zero shift; add the conv bias here (2-D broadcast).
    y = (z[:, (K - 1) * Cout:K * Cout] + b_ref[...]).reshape(B, L, Cout)

    z3 = z.reshape(B, L, cols)
    for k in range(K - 1):
        s = (K - 1 - k) * dil
        if s >= L:
            continue                                          # tap sees only padding
        zk = z3[:, :L - s, k * Cout:(k + 1) * Cout]
        y = y + jnp.concatenate(
            [jnp.zeros((B, s, Cout), jnp.float32), zk], axis=1)

    ds = None
    if bd_ref is not None:                                    # folded 1x1 residual
        ds = (z[:, K * Cout:K * Cout + Cout] + bd_ref[...]).reshape(B, L, Cout)
    return y, ds


def _temporal_block(x, wit, *, K, dil, has_ds):
    """conv1 -> chomp -> ReLU -> conv2 -> chomp -> ReLU -> (+res) -> ReLU."""
    if has_ds:
        w1, b1, bd = next(wit), next(wit), next(wit)
        Cout = b1.shape[1]
        h, res = _causal_conv(x, w1, b1, K=K, dil=dil, Cout=Cout, bd_ref=bd)
    else:
        w1, b1 = next(wit), next(wit)
        Cout = b1.shape[1]
        h, _ = _causal_conv(x, w1, b1, K=K, dil=dil, Cout=Cout)
        res = x                                               # identity residual
    h = jnp.maximum(h, 0.0)
    w2, b2 = next(wit), next(wit)
    h, _ = _causal_conv(h, w2, b2, K=K, dil=dil, Cout=Cout)
    return jnp.maximum(jnp.maximum(h, 0.0) + res, 0.0)


def _maxpool2(x, sel_ref):
    """nn.MaxPool1d(2, 2) over time via ONE precomputed selection matmul.

    sel_ref: stacked [even-row selector; odd-row selector] of shape
    (2*B*Lh, B*L) built in the wrapper.  A single MXU push followed by an
    elementwise max of the two row halves replaces strided sublane gathers
    and any in-kernel iota construction.
    """
    B, L, C = x.shape
    Lh = L // 2
    picked = jnp.dot(sel_ref[...], x.reshape(B * L, C),
                     preferred_element_type=jnp.float32)      # (2*B*Lh, C)
    return jnp.maximum(picked[:B * Lh], picked[B * Lh:]).reshape(B, Lh, C)


# ---------------------------------------------------------------------------
# the fused kernel
# ---------------------------------------------------------------------------
def fdrnet_kernel(*args, meta):
    o_ref = args[-1]
    it = iter(args[:-1])
    envcat_ref, x_ref, f_ref = next(it), next(it), next(it)

    B = meta['B']
    levels = meta['levels']
    n_levels = len(levels)

    # ---- TCN encoder: TemporalBlocks + inter-level MaxPool1d(2,2) ----------
    x = x_ref[...]                                            # (B, L, Cin)
    pools = []
    for lvl, (K, dil, has_ds) in enumerate(levels):
        x = _temporal_block(x, it, K=K, dil=dil, has_ds=has_ds)
        pools.append(jnp.mean(x, axis=1))                     # AdaptiveAvgPool1d(1), pre-maxpool
        if lvl < n_levels - 1:
            sel_ref = next(it)
            x = _maxpool2(x, sel_ref)
    pool_feat = jnp.concatenate(pools, axis=-1)               # (B, sum(Cout)), stays in vregs

    # ---- env embeddings: one matmul over [mass, CE, one_hot(adduct)] -------
    wenv, benv = next(it), next(it)
    env_feat = _matmul(envcat_ref[...], wenv[...]) + benv[...]

    # ---- fc MLP + fdr decoder ----------------------------------------------
    wfc1, bfc1, wfc2, bfc2 = next(it), next(it), next(it), next(it)
    feat = jnp.concatenate([pool_feat, env_feat], axis=-1)    # (B, 2*Clast + env)
    h = jnp.maximum(_matmul(feat, wfc1[...]) + bfc1[...], 0.0)
    enc = _matmul(h, wfc2[...]) + bfc2[...]                   # encoded x

    wd1, bd1, wd2, bd2, wd3, bd3 = (next(it) for _ in range(6))
    z = jnp.concatenate([enc, f_ref[...]], axis=-1)
    d = _leaky_relu(_matmul(z, wd1[...]) + bd1[...])
    d = _leaky_relu(_matmul(d, wd2[...]) + bd2[...])
    d = _leaky_relu(_matmul(d, wd3[...]) + bd3[...])          # (B, 1)

    # (8*, 128) lane-dense, sublane-padded slab -> single unmasked vst.
    rows = o_ref.shape[0]
    if rows > B:
        d = jnp.concatenate([d, jnp.zeros((rows - B, 1), jnp.float32)], axis=0)
    o_ref[...] = jnp.broadcast_to(d, o_ref.shape)


# ---------------------------------------------------------------------------
# wrapper
# ---------------------------------------------------------------------------
def _maxpool_selector(B, L):
    """Stacked [even; odd] time-row selector (2*B*Lh, B*L) for MaxPool1d(2,2)."""
    Lh = L // 2
    sel = np.zeros((2 * B * Lh, B * L), np.float32)
    r = np.arange(B * Lh)
    b, t = r // Lh, r % Lh
    sel[r, b * L + 2 * t] = 1.0
    sel[B * Lh + r, b * L + 2 * t + 1] = 1.0
    return sel


def fdrnet_forward(params, cfg, x, env, f):
    if x.ndim == 2:
        x = x[:, :, None]                                     # (B, L) -> (B, L, 1)
    B, L, _ = x.shape
    assert L > 0 and (L & (L - 1)) == 0, "maxpool selectors assume power-of-two L"

    levels = []
    in_ch = cfg['input_channels']
    for i, out_ch in enumerate(cfg['tcn_channels']):
        levels.append((cfg['tcn_kernel_sizes'][i], cfg['tcn_dilations'][i],
                       in_ch != out_ch))
        in_ch = out_ch
    n_levels = len(levels)

    # ---- env fold: block-diagonal weight over [mass, CE, one_hot(adduct)] --
    mdim, cedim, adim = (cfg['mass_embedding_dim'], cfg['ce_embedding_dim'],
                         cfg['add_embedding_dim'])
    nA = cfg['num_add'] + 1
    env_dim = mdim + cedim + adim
    wenv = jnp.zeros((2 + nA, env_dim), jnp.float32)
    wenv = wenv.at[0, :mdim].set(params['wm'][0])
    wenv = wenv.at[1, mdim:mdim + cedim].set(params['wce'][0])
    wenv = wenv.at[2:, mdim + cedim:].set(params['add_table'])
    benv = jnp.concatenate([params['bm'], params['bce'],
                            jnp.zeros((1, adim), jnp.float32)], axis=1)

    add_ids = jnp.clip(env[:, 2].astype(jnp.int32), 0, nA - 1)      # bounds-safe
    envcat = jnp.concatenate([env[:, :2].astype(jnp.float32),
                              jax.nn.one_hot(add_ids, nA, dtype=jnp.float32)],
                             axis=1)                                 # (B, 2 + nA)

    # ---- precomputed maxpool selection constants (one per pool level) ------
    sels, l_cur = [], L
    for _ in range(n_levels - 1):
        sels.append(jnp.asarray(_maxpool_selector(B, l_cur)))
        l_cur //= 2

    # ---- flat kernel-argument list (must match kernel consumption order) ---
    args = [envcat, x.astype(jnp.float32), f.astype(jnp.float32)]
    for lvl, blk in enumerate(params['tcn']):
        if levels[lvl][2]:                                    # fold 1x1 downsample into conv1
            args += [jnp.concatenate([blk['w1'], blk['wd']], axis=1),
                     blk['b1'], blk['bd']]
        else:
            args += [blk['w1'], blk['b1']]
        args += [blk['w2'], blk['b2']]
        if lvl < n_levels - 1:
            args.append(sels[lvl])
    args += [wenv, benv]
    args += [params[k] for k in ('wfc1', 'bfc1', 'wfc2', 'bfc2',
                                 'wd1', 'bd1', 'wd2', 'bd2', 'wd3', 'bd3')]

    vmem = pl.BlockSpec(memory_space=pltpu.MemorySpace.VMEM)
    meta = dict(B=B, levels=tuple(levels))
    out_rows = ((B + 7) // 8) * 8                             # (8,128)-tile-aligned output

    out = pl.pallas_call(
        functools.partial(fdrnet_kernel, meta=meta),
        out_shape=jax.ShapeDtypeStruct((out_rows, 128), jnp.float32),
        in_specs=[vmem] * len(args),
        out_specs=vmem,
    )(*args)
    return out[:B, 0]                                         # .squeeze(dim=1)


# ---------------------------------------------------------------------------
# parameters (deterministic synthetic init; weight_norm folded in)
# ---------------------------------------------------------------------------
def init_params(key, cfg):
    # The reference fc expects tcn_channels[-1]*2 pooled features.
    assert sum(cfg['tcn_channels']) == 2 * cfg['tcn_channels'][-1]
    keys = iter(jax.random.split(key, 64))

    def rnd(shape, fan_in):
        return (jax.random.normal(next(keys), shape, jnp.float32)
                * (1.0 / math.sqrt(max(fan_in, 1))))

    params = {'tcn': []}
    in_ch = cfg['input_channels']
    for i, out_ch in enumerate(cfg['tcn_channels']):
        K = cfg['tcn_kernel_sizes'][i]
        blk = {
            # conv weights stored tap-column-major: (Cin, K*Cout), column block k
            # holds PyTorch w[:, :, k].T (the weight_norm reparam is folded in).
            'w1': rnd((in_ch, K * out_ch), K * in_ch),
            'b1': jnp.zeros((1, out_ch), jnp.float32),
            'w2': rnd((out_ch, K * out_ch), K * out_ch),
            'b2': jnp.zeros((1, out_ch), jnp.float32),
        }
        if in_ch != out_ch:                                   # 1x1 downsample conv
            blk['wd'] = rnd((in_ch, out_ch), in_ch)
            blk['bd'] = jnp.zeros((1, out_ch), jnp.float32)
        params['tcn'].append(blk)
        in_ch = out_ch

    mdim, cedim, adim = (cfg['mass_embedding_dim'], cfg['ce_embedding_dim'],
                         cfg['add_embedding_dim'])
    env_dim = mdim + cedim + adim
    edim, odim = cfg['embedding_dim'], cfg['output_dim']
    fc_in = cfg['tcn_channels'][-1] * 2 + env_dim

    params.update({
        'wm': rnd((1, mdim), 1), 'bm': jnp.zeros((1, mdim), jnp.float32),
        'wce': rnd((1, cedim), 1), 'bce': jnp.zeros((1, cedim), jnp.float32),
        'add_table': 0.01 * jax.random.normal(next(keys),
                                              (cfg['num_add'] + 1, adim), jnp.float32),
        'wfc1': rnd((fc_in, edim), fc_in), 'bfc1': jnp.zeros((1, edim), jnp.float32),
        'wfc2': rnd((edim, edim), edim), 'bfc2': jnp.zeros((1, edim), jnp.float32),
    })

    # fdr decoder: input_dim = embedding_dim + output_dim (FDRNet override)
    dims = [edim + odim] + list(cfg['fdr_decoder_layers']) + [1]
    params['wd1'] = rnd((dims[0], dims[1]), dims[0])
    params['bd1'] = jnp.zeros((1, dims[1]), jnp.float32)
    params['wd2'] = rnd((dims[1], dims[2]), dims[1])
    params['bd2'] = jnp.zeros((1, dims[2]), jnp.float32)
    params['wd3'] = rnd((dims[2], dims[3]), dims[2])
    params['bd3'] = jnp.zeros((1, dims[3]), jnp.float32)
    return params


# ---------------------------------------------------------------------------
# main
# ---------------------------------------------------------------------------
if __name__ == "__main__":
    config = dict(
        input_channels=1,
        tcn_channels=[8, 8, 16],     # sum == 2 * last, matching fc in_features
        tcn_dilations=[1, 2, 4],
        tcn_kernel_sizes=[3, 3, 3],
        tcn_dropout=0.0,
        mass_embedding_dim=4,
        ce_embedding_dim=4,
        add_embedding_dim=8,
        num_add=5,
        embedding_dim=32,
        output_dim=8,
        fdr_decoder_layers=[32, 16],
    )

    key = jax.random.PRNGKey(0)
    kp, kx, kenv, kf = jax.random.split(key, 4)
    params = init_params(kp, config)

    B, L = 2, 16
    x = jax.random.normal(kx, (B, L), jnp.float32)            # spectrum (B, seq)
    env_cont = jax.random.normal(kenv, (B, 2), jnp.float32)   # mass, CE
    add_ids = jnp.array([[1.0], [3.0]], jnp.float32)          # adduct id as float
    env = jnp.concatenate([env_cont, add_ids], axis=1)        # (B, 3)
    f = jax.random.normal(kf, (B, config['output_dim']), jnp.float32)

    fwd = jax.jit(lambda p, xx, ee, ff: fdrnet_forward(p, config, xx, ee, ff))
    fdr = fwd(params, x, env, f)
    fdr = jax.block_until_ready(fdr)
    assert fdr.shape == (B,) and fdr.dtype == jnp.float32
    print("KERNEL_OK")
</pallas_src>

<mosaic_0001>
module attributes {stable_mosaic.version = 11 : i64} {
  func.func @fdrnet_kernel(%arg0: memref<2x8xf32, #tpu.memory_space<vmem>>, %arg1: memref<2x16x1xf32, #tpu.memory_space<vmem>>, %arg2: memref<2x8xf32, #tpu.memory_space<vmem>>, %arg3: memref<1x32xf32, #tpu.memory_space<vmem>>, %arg4: memref<1x8xf32, #tpu.memory_space<vmem>>, %arg5: memref<1x8xf32, #tpu.memory_space<vmem>>, %arg6: memref<8x24xf32, #tpu.memory_space<vmem>>, %arg7: memref<1x8xf32, #tpu.memory_space<vmem>>, %arg8: memref<32x32xf32, #tpu.memory_space<vmem>>, %arg9: memref<8x24xf32, #tpu.memory_space<vmem>>, %arg10: memref<1x8xf32, #tpu.memory_space<vmem>>, %arg11: memref<8x24xf32, #tpu.memory_space<vmem>>, %arg12: memref<1x8xf32, #tpu.memory_space<vmem>>, %arg13: memref<16x16xf32, #tpu.memory_space<vmem>>, %arg14: memref<8x64xf32, #tpu.memory_space<vmem>>, %arg15: memref<1x16xf32, #tpu.memory_space<vmem>>, %arg16: memref<1x16xf32, #tpu.memory_space<vmem>>, %arg17: memref<16x48xf32, #tpu.memory_space<vmem>>, %arg18: memref<1x16xf32, #tpu.memory_space<vmem>>, %arg19: memref<8x16xf32, #tpu.memory_space<vmem>>, %arg20: memref<1x16xf32, #tpu.memory_space<vmem>>, %arg21: memref<48x32xf32, #tpu.memory_space<vmem>>, %arg22: memref<1x32xf32, #tpu.memory_space<vmem>>, %arg23: memref<32x32xf32, #tpu.memory_space<vmem>>, %arg24: memref<1x32xf32, #tpu.memory_space<vmem>>, %arg25: memref<40x32xf32, #tpu.memory_space<vmem>>, %arg26: memref<1x32xf32, #tpu.memory_space<vmem>>, %arg27: memref<32x16xf32, #tpu.memory_space<vmem>>, %arg28: memref<1x16xf32, #tpu.memory_space<vmem>>, %arg29: memref<16x1xf32, #tpu.memory_space<vmem>>, %arg30: memref<1x1xf32, #tpu.memory_space<vmem>>, %arg31: memref<8x128xf32, #tpu.memory_space<vmem>>) attributes {dimension_semantics = [], scalar_prefetch = 0 : i64, scratch_operands = 0 : i64, tpu.core_type = #tpu.core_type<tc>} {
    %c0 = arith.constant 0 : index
    %c0_0 = arith.constant 0 : index
    %c0_1 = arith.constant 0 : index
    %0 = vector.load %arg1[%c0, %c0_0, %c0_1] : memref<2x16x1xf32, #tpu.memory_space<vmem>>, vector<2x16x1xf32>
    %1 = vector.shape_cast %0 : vector<2x16x1xf32> to vector<32x1xf32>
    %c0_2 = arith.constant 0 : index
    %c0_3 = arith.constant 0 : index
    %2 = vector.load %arg3[%c0_2, %c0_3] : memref<1x32xf32, #tpu.memory_space<vmem>>, vector<1x32xf32>
    %3 = vector.broadcast %1 : vector<32x1xf32> to vector<32x32xf32>
    %4 = vector.broadcast %2 : vector<1x32xf32> to vector<32x32xf32>
    %5 = arith.mulf %3, %4 : vector<32x32xf32>
    %6 = vector.extract_strided_slice %5 {offsets = [0, 16], sizes = [32, 8], strides = [1, 1]} : vector<32x32xf32> to vector<32x8xf32>
    %c0_4 = arith.constant 0 : index
    %c0_5 = arith.constant 0 : index
    %7 = vector.load %arg4[%c0_4, %c0_5] : memref<1x8xf32, #tpu.memory_space<vmem>>, vector<1x8xf32>
    %8 = vector.broadcast %7 : vector<1x8xf32> to vector<32x8xf32>
    %9 = arith.addf %6, %8 : vector<32x8xf32>
    %10 = vector.shape_cast %9 : vector<32x8xf32> to vector<2x16x8xf32>
    %11 = vector.shape_cast %5 : vector<32x32xf32> to vector<2x16x32xf32>
    %12 = vector.extract_strided_slice %11 {offsets = [0, 0, 0], sizes = [2, 14, 8], strides = [1, 1, 1]} : vector<2x16x32xf32> to vector<2x14x8xf32>
    %cst = arith.constant 0.000000e+00 : f32
    %13 = vector.broadcast %cst : f32 to vector<2x2x8xf32>
    %14 = tpu.concatenate %13, %12 in 1 : vector<2x2x8xf32>, vector<2x14x8xf32> -> vector<2x16x8xf32>
    %15 = arith.addf %10, %14 : vector<2x16x8xf32>
    %16 = vector.extract_strided_slice %11 {offsets = [0, 0, 8], sizes = [2, 15, 8], strides = [1, 1, 1]} : vector<2x16x32xf32> to vector<2x15x8xf32>
    %cst_6 = arith.constant 0.000000e+00 : f32
    %17 = vector.broadcast %cst_6 : f32 to vector<2x1x8xf32>
    %18 = tpu.concatenate %17, %16 in 1 : vector<2x1x8xf32>, vector<2x15x8xf32> -> vector<2x16x8xf32>
    %19 = arith.addf %15, %18 : vector<2x16x8xf32>
    %20 = vector.extract_strided_slice %5 {offsets = [0, 24], sizes = [32, 8], strides = [1, 1]} : vector<32x32xf32> to vector<32x8xf32>
    %c0_7 = arith.constant 0 : index
    %c0_8 = arith.constant 0 : index
    %21 = vector.load %arg5[%c0_7, %c0_8] : memref<1x8xf32, #tpu.memory_space<vmem>>, vector<1x8xf32>
    %22 = vector.broadcast %21 : vector<1x8xf32> to vector<32x8xf32>
    %23 = arith.addf %20, %22 : vector<32x8xf32>
    %24 = vector.shape_cast %23 : vector<32x8xf32> to vector<2x16x8xf32>
    %cst_9 = arith.constant 0.000000e+00 : f32
    %25 = vector.broadcast %cst_9 : f32 to vector<2x16x8xf32>
    %26 = arith.maximumf %19, %25 : vector<2x16x8xf32>
    %27 = vector.shape_cast %26 : vector<2x16x8xf32> to vector<32x8xf32>
    %c0_10 = arith.constant 0 : index
    %c0_11 = arith.constant 0 : index
    %28 = vector.load %arg6[%c0_10, %c0_11] : memref<8x24xf32, #tpu.memory_space<vmem>>, vector<8x24xf32>
    %cst_12 = arith.constant dense<0.000000e+00> : vector<32x24xf32>
    %29 = tpu.matmul %27, %28, %cst_12 {dimension_numbers = #tpu.dot_dimension_numbers<[1], [0], [0], [1], [0, 0, 1, 1], [], []>} : vector<32x8xf32>, vector<8x24xf32>, vector<32x24xf32> -> vector<32x24xf32>
    %30 = vector.extract_strided_slice %29 {offsets = [0, 16], sizes = [32, 8], strides = [1, 1]} : vector<32x24xf32> to vector<32x8xf32>
    %c0_13 = arith.constant 0 : index
    %c0_14 = arith.constant 0 : index
    %31 = vector.load %arg7[%c0_13, %c0_14] : memref<1x8xf32, #tpu.memory_space<vmem>>, vector<1x8xf32>
    %32 = vector.broadcast %31 : vector<1x8xf32> to vector<32x8xf32>
    %33 = arith.addf %30, %32 : vector<32x8xf32>
    %34 = vector.shape_cast %33 : vector<32x8xf32> to vector<2x16x8xf32>
    %35 = vector.shape_cast %29 : vector<32x24xf32> to vector<2x16x24xf32>
    %36 = vector.extract_strided_slice %35 {offsets = [0, 0, 0], sizes = [2, 14, 8], strides = [1, 1, 1]} : vector<2x16x24xf32> to vector<2x14x8xf32>
    %cst_15 = arith.constant 0.000000e+00 : f32
    %37 = vector.broadcast %cst_15 : f32 to vector<2x2x8xf32>
    %38 = tpu.concatenate %37, %36 in 1 : vector<2x2x8xf32>, vector<2x14x8xf32> -> vector<2x16x8xf32>
    %39 = arith.addf %34, %38 : vector<2x16x8xf32>
    %40 = vector.extract_strided_slice %35 {offsets = [0, 0, 8], sizes = [2, 15, 8], strides = [1, 1, 1]} : vector<2x16x24xf32> to vector<2x15x8xf32>
    %cst_16 = arith.constant 0.000000e+00 : f32
    %41 = vector.broadcast %cst_16 : f32 to vector<2x1x8xf32>
    %42 = tpu.concatenate %41, %40 in 1 : vector<2x1x8xf32>, vector<2x15x8xf32> -> vector<2x16x8xf32>
    %43 = arith.addf %39, %42 : vector<2x16x8xf32>
    %cst_17 = arith.constant 0.000000e+00 : f32
    %44 = vector.broadcast %cst_17 : f32 to vector<2x16x8xf32>
    %45 = arith.maximumf %43, %44 : vector<2x16x8xf32>
    %46 = arith.addf %45, %24 : vector<2x16x8xf32>
    %cst_18 = arith.constant 0.000000e+00 : f32
    %47 = vector.broadcast %cst_18 : f32 to vector<2x16x8xf32>
    %48 = arith.maximumf %46, %47 : vector<2x16x8xf32>
    %cst_19 = arith.constant dense<0.000000e+00> : vector<2x8xf32>
    %49 = vector.multi_reduction <add>, %48, %cst_19 [1] : vector<2x16x8xf32> to vector<2x8xf32>
    %cst_20 = arith.constant 1.600000e+01 : f32
    %50 = vector.broadcast %cst_20 : f32 to vector<2x8xf32>
    %51 = arith.divf %49, %50 : vector<2x8xf32>
    %c0_21 = arith.constant 0 : index
    %c0_22 = arith.constant 0 : index
    %52 = vector.load %arg8[%c0_21, %c0_22] : memref<32x32xf32, #tpu.memory_space<vmem>>, vector<32x32xf32>
    %53 = vector.shape_cast %48 : vector<2x16x8xf32> to vector<32x8xf32>
    %cst_23 = arith.constant dense<0.000000e+00> : vector<32x8xf32>
    %54 = tpu.matmul %52, %53, %cst_23 {dimension_numbers = #tpu.dot_dimension_numbers<[1], [0], [0], [1], [0, 0, 1, 1], [], []>} : vector<32x32xf32>, vector<32x8xf32>, vector<32x8xf32> -> vector<32x8xf32>
    %55 = vector.extract_strided_slice %54 {offsets = [0, 0], sizes = [16, 8], strides = [1, 1]} : vector<32x8xf32> to vector<16x8xf32>
    %56 = vector.extract_strided_slice %54 {offsets = [16, 0], sizes = [16, 8], strides = [1, 1]} : vector<32x8xf32> to vector<16x8xf32>
    %57 = arith.maximumf %55, %56 : vector<16x8xf32>
    %58 = vector.shape_cast %57 : vector<16x8xf32> to vector<2x8x8xf32>
    %59 = vector.shape_cast %58 : vector<2x8x8xf32> to vector<16x8xf32>
    %c0_24 = arith.constant 0 : index
    %c0_25 = arith.constant 0 : index
    %60 = vector.load %arg9[%c0_24, %c0_25] : memref<8x24xf32, #tpu.memory_space<vmem>>, vector<8x24xf32>
    %cst_26 = arith.constant dense<0.000000e+00> : vector<16x24xf32>
    %61 = tpu.matmul %59, %60, %cst_26 {dimension_numbers = #tpu.dot_dimension_numbers<[1], [0], [0], [1], [0, 0, 1, 1], [], []>} : vector<16x8xf32>, vector<8x24xf32>, vector<16x24xf32> -> vector<16x24xf32>
    %62 = vector.extract_strided_slice %61 {offsets = [0, 16], sizes = [16, 8], strides = [1, 1]} : vector<16x24xf32> to vector<16x8xf32>
    %c0_27 = arith.constant 0 : index
    %c0_28 = arith.constant 0 : index
    %63 = vector.load %arg10[%c0_27, %c0_28] : memref<1x8xf32, #tpu.memory_space<vmem>>, vector<1x8xf32>
    %64 = vector.broadcast %63 : vector<1x8xf32> to vector<16x8xf32>
    %65 = arith.addf %62, %64 : vector<16x8xf32>
    %66 = vector.shape_cast %65 : vector<16x8xf32> to vector<2x8x8xf32>
    %67 = vector.shape_cast %61 : vector<16x24xf32> to vector<2x8x24xf32>
    %68 = vector.extract_strided_slice %67 {offsets = [0, 0, 0], sizes = [2, 4, 8], strides = [1, 1, 1]} : vector<2x8x24xf32> to vector<2x4x8xf32>
    %cst_29 = arith.constant 0.000000e+00 : f32
    %69 = vector.broadcast %cst_29 : f32 to vector<2x4x8xf32>
    %70 = tpu.concatenate %69, %68 in 1 : vector<2x4x8xf32>, vector<2x4x8xf32> -> vector<2x8x8xf32>
    %71 = arith.addf %66, %70 : vector<2x8x8xf32>
    %72 = vector.extract_strided_slice %67 {offsets = [0, 0, 8], sizes = [2, 6, 8], strides = [1, 1, 1]} : vector<2x8x24xf32> to vector<2x6x8xf32>
    %cst_30 = arith.constant 0.000000e+00 : f32
    %73 = vector.broadcast %cst_30 : f32 to vector<2x2x8xf32>
    %74 = tpu.concatenate %73, %72 in 1 : vector<2x2x8xf32>, vector<2x6x8xf32> -> vector<2x8x8xf32>
    %75 = arith.addf %71, %74 : vector<2x8x8xf32>
    %cst_31 = arith.constant 0.000000e+00 : f32
    %76 = vector.broadcast %cst_31 : f32 to vector<2x8x8xf32>
    %77 = arith.maximumf %75, %76 : vector<2x8x8xf32>
    %78 = vector.shape_cast %77 : vector<2x8x8xf32> to vector<16x8xf32>
    %c0_32 = arith.constant 0 : index
    %c0_33 = arith.constant 0 : index
    %79 = vector.load %arg11[%c0_32, %c0_33] : memref<8x24xf32, #tpu.memory_space<vmem>>, vector<8x24xf32>
    %cst_34 = arith.constant dense<0.000000e+00> : vector<16x24xf32>
    %80 = tpu.matmul %78, %79, %cst_34 {dimension_numbers = #tpu.dot_dimension_numbers<[1], [0], [0], [1], [0, 0, 1, 1], [], []>} : vector<16x8xf32>, vector<8x24xf32>, vector<16x24xf32> -> vector<16x24xf32>
    %81 = vector.extract_strided_slice %80 {offsets = [0, 16], sizes = [16, 8], strides = [1, 1]} : vector<16x24xf32> to vector<16x8xf32>
    %c0_35 = arith.constant 0 : index
    %c0_36 = arith.constant 0 : index
    %82 = vector.load %arg12[%c0_35, %c0_36] : memref<1x8xf32, #tpu.memory_space<vmem>>, vector<1x8xf32>
    %83 = vector.broadcast %82 : vector<1x8xf32> to vector<16x8xf32>
    %84 = arith.addf %81, %83 : vector<16x8xf32>
    %85 = vector.shape_cast %84 : vector<16x8xf32> to vector<2x8x8xf32>
    %86 = vector.shape_cast %80 : vector<16x24xf32> to vector<2x8x24xf32>
    %87 = vector.extract_strided_slice %86 {offsets = [0, 0, 0], sizes = [2, 4, 8], strides = [1, 1, 1]} : vector<2x8x24xf32> to vector<2x4x8xf32>
    %cst_37 = arith.constant 0.000000e+00 : f32
    %88 = vector.broadcast %cst_37 : f32 to vector<2x4x8xf32>
    %89 = tpu.concatenate %88, %87 in 1 : vector<2x4x8xf32>, vector<2x4x8xf32> -> vector<2x8x8xf32>
    %90 = arith.addf %85, %89 : vector<2x8x8xf32>
    %91 = vector.extract_strided_slice %86 {offsets = [0, 0, 8], sizes = [2, 6, 8], strides = [1, 1, 1]} : vector<2x8x24xf32> to vector<2x6x8xf32>
    %cst_38 = arith.constant 0.000000e+00 : f32
    %92 = vector.broadcast %cst_38 : f32 to vector<2x2x8xf32>
    %93 = tpu.concatenate %92, %91 in 1 : vector<2x2x8xf32>, vector<2x6x8xf32> -> vector<2x8x8xf32>
    %94 = arith.addf %90, %93 : vector<2x8x8xf32>
    %cst_39 = arith.constant 0.000000e+00 : f32
    %95 = vector.broadcast %cst_39 : f32 to vector<2x8x8xf32>
    %96 = arith.maximumf %94, %95 : vector<2x8x8xf32>
    %97 = arith.addf %96, %58 : vector<2x8x8xf32>
    %cst_40 = arith.constant 0.000000e+00 : f32
    %98 = vector.broadcast %cst_40 : f32 to vector<2x8x8xf32>
    %99 = arith.maximumf %97, %98 : vector<2x8x8xf32>
    %cst_41 = arith.constant dense<0.000000e+00> : vector<2x8xf32>
    %100 = vector.multi_reduction <add>, %99, %cst_41 [1] : vector<2x8x8xf32> to vector<2x8xf32>
    %cst_42 = arith.constant 8.000000e+00 : f32
    %101 = vector.broadcast %cst_42 : f32 to vector<2x8xf32>
    %102 = arith.divf %100, %101 : vector<2x8xf32>
    %c0_43 = arith.constant 0 : index
    %c0_44 = arith.constant 0 : index
    %103 = vector.load %arg13[%c0_43, %c0_44] : memref<16x16xf32, #tpu.memory_space<vmem>>, vector<16x16xf32>
    %104 = vector.shape_cast %99 : vector<2x8x8xf32> to vector<16x8xf32>
    %cst_45 = arith.constant dense<0.000000e+00> : vector<16x8xf32>
    %105 = tpu.matmul %103, %104, %cst_45 {dimension_numbers = #tpu.dot_dimension_numbers<[1], [0], [0], [1], [0, 0, 1, 1], [], []>} : vector<16x16xf32>, vector<16x8xf32>, vector<16x8xf32> -> vector<16x8xf32>
    %106 = vector.extract_strided_slice %105 {offsets = [0, 0], sizes = [8, 8], strides = [1, 1]} : vector<16x8xf32> to vector<8x8xf32>
    %107 = vector.extract_strided_slice %105 {offsets = [8, 0], sizes = [8, 8], strides = [1, 1]} : vector<16x8xf32> to vector<8x8xf32>
    %108 = arith.maximumf %106, %107 : vector<8x8xf32>
    %109 = vector.shape_cast %108 : vector<8x8xf32> to vector<2x4x8xf32>
    %110 = vector.shape_cast %109 : vector<2x4x8xf32> to vector<8x8xf32>
    %c0_46 = arith.constant 0 : index
    %c0_47 = arith.constant 0 : index
    %111 = vector.load %arg14[%c0_46, %c0_47] : memref<8x64xf32, #tpu.memory_space<vmem>>, vector<8x64xf32>
    %cst_48 = arith.constant dense<0.000000e+00> : vector<8x64xf32>
    %112 = tpu.matmul %110, %111, %cst_48 {dimension_numbers = #tpu.dot_dimension_numbers<[1], [0], [0], [1], [0, 0, 1, 1], [], []>} : vector<8x8xf32>, vector<8x64xf32>, vector<8x64xf32> -> vector<8x64xf32>
    %113 = vector.extract_strided_slice %112 {offsets = [0, 32], sizes = [8, 16], strides = [1, 1]} : vector<8x64xf32> to vector<8x16xf32>
    %c0_49 = arith.constant 0 : index
    %c0_50 = arith.constant 0 : index
    %114 = vector.load %arg15[%c0_49, %c0_50] : memref<1x16xf32, #tpu.memory_space<vmem>>, vector<1x16xf32>
    %115 = vector.broadcast %114 : vector<1x16xf32> to vector<8x16xf32>
    %116 = arith.addf %113, %115 : vector<8x16xf32>
    %117 = vector.shape_cast %116 : vector<8x16xf32> to vector<2x4x16xf32>
    %118 = vector.extract_strided_slice %112 {offsets = [0, 48], sizes = [8, 16], strides = [1, 1]} : vector<8x64xf32> to vector<8x16xf32>
    %c0_51 = arith.constant 0 : index
    %c0_52 = arith.constant 0 : index
    %119 = vector.load %arg16[%c0_51, %c0_52] : memref<1x16xf32, #tpu.memory_space<vmem>>, vector<1x16xf32>
    %120 = vector.broadcast %119 : vector<1x16xf32> to vector<8x16xf32>
    %121 = arith.addf %118, %120 : vector<8x16xf32>
    %122 = vector.shape_cast %121 : vector<8x16xf32> to vector<2x4x16xf32>
    %cst_53 = arith.constant 0.000000e+00 : f32
    %123 = vector.broadcast %cst_53 : f32 to vector<2x4x16xf32>
    %124 = arith.maximumf %117, %123 : vector<2x4x16xf32>
    %125 = vector.shape_cast %124 : vector<2x4x16xf32> to vector<8x16xf32>
    %c0_54 = arith.constant 0 : index
    %c0_55 = arith.constant 0 : index
    %126 = vector.load %arg17[%c0_54, %c0_55] : memref<16x48xf32, #tpu.memory_space<vmem>>, vector<16x48xf32>
    %cst_56 = arith.constant dense<0.000000e+00> : vector<8x48xf32>
    %127 = tpu.matmul %125, %126, %cst_56 {dimension_numbers = #tpu.dot_dimension_numbers<[1], [0], [0], [1], [0, 0, 1, 1], [], []>} : vector<8x16xf32>, vector<16x48xf32>, vector<8x48xf32> -> vector<8x48xf32>
    %128 = vector.extract_strided_slice %127 {offsets = [0, 32], sizes = [8, 16], strides = [1, 1]} : vector<8x48xf32> to vector<8x16xf32>
    %c0_57 = arith.constant 0 : index
    %c0_58 = arith.constant 0 : index
    %129 = vector.load %arg18[%c0_57, %c0_58] : memref<1x16xf32, #tpu.memory_space<vmem>>, vector<1x16xf32>
    %130 = vector.broadcast %129 : vector<1x16xf32> to vector<8x16xf32>
    %131 = arith.addf %128, %130 : vector<8x16xf32>
    %132 = vector.shape_cast %131 : vector<8x16xf32> to vector<2x4x16xf32>
    %cst_59 = arith.constant 0.000000e+00 : f32
    %133 = vector.broadcast %cst_59 : f32 to vector<2x4x16xf32>
    %134 = arith.maximumf %132, %133 : vector<2x4x16xf32>
    %135 = arith.addf %134, %122 : vector<2x4x16xf32>
    %cst_60 = arith.constant 0.000000e+00 : f32
    %136 = vector.broadcast %cst_60 : f32 to vector<2x4x16xf32>
    %137 = arith.maximumf %135, %136 : vector<2x4x16xf32>
    %cst_61 = arith.constant dense<0.000000e+00> : vector<2x16xf32>
    %138 = vector.multi_reduction <add>, %137, %cst_61 [1] : vector<2x4x16xf32> to vector<2x16xf32>
    %cst_62 = arith.constant 4.000000e+00 : f32
    %139 = vector.broadcast %cst_62 : f32 to vector<2x16xf32>
    %140 = arith.divf %138, %139 : vector<2x16xf32>
    %141 = tpu.concatenate %51, %102, %140 in 1 : vector<2x8xf32>, vector<2x8xf32>, vector<2x16xf32> -> vector<2x32xf32>
    %c0_63 = arith.constant 0 : index
    %c0_64 = arith.constant 0 : index
    %142 = vector.load %arg0[%c0_63, %c0_64] : memref<2x8xf32, #tpu.memory_space<vmem>>, vector<2x8xf32>
    %c0_65 = arith.constant 0 : index
    %c0_66 = arith.constant 0 : index
    %143 = vector.load %arg19[%c0_65, %c0_66] : memref<8x16xf32, #tpu.memory_space<vmem>>, vector<8x16xf32>
    %cst_67 = arith.constant dense<0.000000e+00> : vector<2x16xf32>
    %144 = tpu.matmul %142, %143, %cst_67 {dimension_numbers = #tpu.dot_dimension_numbers<[1], [0], [0], [1], [0, 0, 1, 1], [], []>} : vector<2x8xf32>, vector<8x16xf32>, vector<2x16xf32> -> vector<2x16xf32>
    %c0_68 = arith.constant 0 : index
    %c0_69 = arith.constant 0 : index
    %145 = vector.load %arg20[%c0_68, %c0_69] : memref<1x16xf32, #tpu.memory_space<vmem>>, vector<1x16xf32>
    %146 = vector.broadcast %145 : vector<1x16xf32> to vector<2x16xf32>
    %147 = arith.addf %144, %146 : vector<2x16xf32>
    %148 = tpu.concatenate %141, %147 in 1 : vector<2x32xf32>, vector<2x16xf32> -> vector<2x48xf32>
    %c0_70 = arith.constant 0 : index
    %c0_71 = arith.constant 0 : index
    %149 = vector.load %arg21[%c0_70, %c0_71] : memref<48x32xf32, #tpu.memory_space<vmem>>, vector<48x32xf32>
    %cst_72 = arith.constant dense<0.000000e+00> : vector<2x32xf32>
    %150 = tpu.matmul %148, %149, %cst_72 {dimension_numbers = #tpu.dot_dimension_numbers<[1], [0], [0], [1], [0, 0, 1, 1], [], []>} : vector<2x48xf32>, vector<48x32xf32>, vector<2x32xf32> -> vector<2x32xf32>
    %c0_73 = arith.constant 0 : index
    %c0_74 = arith.constant 0 : index
    %151 = vector.load %arg22[%c0_73, %c0_74] : memref<1x32xf32, #tpu.memory_space<vmem>>, vector<1x32xf32>
    %152 = vector.broadcast %151 : vector<1x32xf32> to vector<2x32xf32>
    %153 = arith.addf %150, %152 : vector<2x32xf32>
    %cst_75 = arith.constant 0.000000e+00 : f32
    %154 = vector.broadcast %cst_75 : f32 to vector<2x32xf32>
    %155 = arith.maximumf %153, %154 : vector<2x32xf32>
    %c0_76 = arith.constant 0 : index
    %c0_77 = arith.constant 0 : index
    %156 = vector.load %arg23[%c0_76, %c0_77] : memref<32x32xf32, #tpu.memory_space<vmem>>, vector<32x32xf32>
    %cst_78 = arith.constant dense<0.000000e+00> : vector<2x32xf32>
    %157 = tpu.matmul %155, %156, %cst_78 {dimension_numbers = #tpu.dot_dimension_numbers<[1], [0], [0], [1], [0, 0, 1, 1], [], []>} : vector<2x32xf32>, vector<32x32xf32>, vector<2x32xf32> -> vector<2x32xf32>
    %c0_79 = arith.constant 0 : index
    %c0_80 = arith.constant 0 : index
    %158 = vector.load %arg24[%c0_79, %c0_80] : memref<1x32xf32, #tpu.memory_space<vmem>>, vector<1x32xf32>
    %159 = vector.broadcast %158 : vector<1x32xf32> to vector<2x32xf32>
    %160 = arith.addf %157, %159 : vector<2x32xf32>
    %c0_81 = arith.constant 0 : index
    %c0_82 = arith.constant 0 : index
    %161 = vector.load %arg2[%c0_81, %c0_82] : memref<2x8xf32, #tpu.memory_space<vmem>>, vector<2x8xf32>
    %162 = tpu.concatenate %160, %161 in 1 : vector<2x32xf32>, vector<2x8xf32> -> vector<2x40xf32>
    %c0_83 = arith.constant 0 : index
    %c0_84 = arith.constant 0 : index
    %163 = vector.load %arg25[%c0_83, %c0_84] : memref<40x32xf32, #tpu.memory_space<vmem>>, vector<40x32xf32>
    %cst_85 = arith.constant dense<0.000000e+00> : vector<2x32xf32>
    %164 = tpu.matmul %162, %163, %cst_85 {dimension_numbers = #tpu.dot_dimension_numbers<[1], [0], [0], [1], [0, 0, 1, 1], [], []>} : vector<2x40xf32>, vector<40x32xf32>, vector<2x32xf32> -> vector<2x32xf32>
    %c0_86 = arith.constant 0 : index
    %c0_87 = arith.constant 0 : index
    %165 = vector.load %arg26[%c0_86, %c0_87] : memref<1x32xf32, #tpu.memory_space<vmem>>, vector<1x32xf32>
    %166 = vector.broadcast %165 : vector<1x32xf32> to vector<2x32xf32>
    %167 = arith.addf %164, %166 : vector<2x32xf32>
    %cst_88 = arith.constant 0.000000e+00 : f32
    %168 = vector.broadcast %cst_88 : f32 to vector<2x32xf32>
    %169 = arith.cmpf oge, %167, %168 : vector<2x32xf32>
    %cst_89 = arith.constant 2.000000e-01 : f32
    %170 = vector.broadcast %cst_89 : f32 to vector<2x32xf32>
    %171 = arith.mulf %170, %167 : vector<2x32xf32>
    %172 = arith.select %169, %167, %171 : vector<2x32xi1>, vector<2x32xf32>
    %c0_90 = arith.constant 0 : index
    %c0_91 = arith.constant 0 : index
    %173 = vector.load %arg27[%c0_90, %c0_91] : memref<32x16xf32, #tpu.memory_space<vmem>>, vector<32x16xf32>
    %cst_92 = arith.constant dense<0.000000e+00> : vector<2x16xf32>
    %174 = tpu.matmul %172, %173, %cst_92 {dimension_numbers = #tpu.dot_dimension_numbers<[1], [0], [0], [1], [0, 0, 1, 1], [], []>} : vector<2x32xf32>, vector<32x16xf32>, vector<2x16xf32> -> vector<2x16xf32>
    %c0_93 = arith.constant 0 : index
    %c0_94 = arith.constant 0 : index
    %175 = vector.load %arg28[%c0_93, %c0_94] : memref<1x16xf32, #tpu.memory_space<vmem>>, vector<1x16xf32>
    %176 = vector.broadcast %175 : vector<1x16xf32> to vector<2x16xf32>
    %177 = arith.addf %174, %176 : vector<2x16xf32>
    %cst_95 = arith.constant 0.000000e+00 : f32
    %178 = vector.broadcast %cst_95 : f32 to vector<2x16xf32>
    %179 = arith.cmpf oge, %177, %178 : vector<2x16xf32>
    %cst_96 = arith.constant 2.000000e-01 : f32
    %180 = vector.broadcast %cst_96 : f32 to vector<2x16xf32>
    %181 = arith.mulf %180, %177 : vector<2x16xf32>
    %182 = arith.select %179, %177, %181 : vector<2x16xi1>, vector<2x16xf32>
    %c0_97 = arith.constant 0 : index
    %c0_98 = arith.constant 0 : index
    %183 = vector.load %arg29[%c0_97, %c0_98] : memref<16x1xf32, #tpu.memory_space<vmem>>, vector<16x1xf32>
    %cst_99 = arith.constant dense<0.000000e+00> : vector<2x1xf32>
    %184 = tpu.matmul %182, %183, %cst_99 {dimension_numbers = #tpu.dot_dimension_numbers<[1], [0], [0], [1], [0, 0, 1, 1], [], []>} : vector<2x16xf32>, vector<16x1xf32>, vector<2x1xf32> -> vector<2x1xf32>
    %c0_100 = arith.constant 0 : index
    %c0_101 = arith.constant 0 : index
    %185 = vector.load %arg30[%c0_100, %c0_101] : memref<1x1xf32, #tpu.memory_space<vmem>>, vector<1x1xf32>
    %186 = vector.broadcast %185 : vector<1x1xf32> to vector<2x1xf32>
    %187 = arith.addf %184, %186 : vector<2x1xf32>
    %cst_102 = arith.constant 0.000000e+00 : f32
    %188 = vector.broadcast %cst_102 : f32 to vector<2x1xf32>
    %189 = arith.cmpf oge, %187, %188 : vector<2x1xf32>
    %cst_103 = arith.constant 2.000000e-01 : f32
    %190 = vector.broadcast %cst_103 : f32 to vector<2x1xf32>
    %191 = arith.mulf %190, %187 : vector<2x1xf32>
    %192 = arith.select %189, %187, %191 : vector<2x1xi1>, vector<2x1xf32>
    %cst_104 = arith.constant 0.000000e+00 : f32
    %193 = vector.broadcast %cst_104 : f32 to vector<6x1xf32>
    %194 = tpu.concatenate %192, %193 in 0 : vector<2x1xf32>, vector<6x1xf32> -> vector<8x1xf32>
    %195 = vector.shape_cast %194 : vector<8x1xf32> to vector<8x1xf32>
    %196 = vector.broadcast %195 : vector<8x1xf32> to vector<8x128xf32>
    %c0_105 = arith.constant 0 : index
    %c0_106 = arith.constant 0 : index
    %197 = vector.load %arg31[%c0_105, %c0_106] : memref<8x128xf32, #tpu.memory_space<vmem>>, vector<8x128xf32>
    tpu.vector_store %arg31[%c0_105, %c0_106], %196 {strides = array<i32>} : memref<8x128xf32, #tpu.memory_space<vmem>>, vector<8x128xf32>,
    return
  }
}

</mosaic_0001>

<llo_original>
// kernel: _lambda_.1
$region0: #{_lambda_.1}
  #allocation0 [shape = 'u32[]', space=smem, size = 0x4, offset = 0x4, fixed_abs, tag = 'smem constant byte address 0x4 - core index']
  #allocation1 [shape = 'u32[72,128]{1,0:T(1,128)}', space=vmem, size = 0x9000, scoped, tag = 'internal scratch']
  #allocation2 [shape = 'f32[1,1]{1,0:T(1,128)S(1)}', space=vmem, size = 0x200, scoped, tag = 'scoped memory for _lambda_.1']
  %s0 = inlined_call_operand.smem [shape: u32[32], index: -1, kind: input, shape index: {}]
  %s1 = sld [smem:[%s0]]
  %s2 = scalar_lea.smem %s0, 1
  %s3 = sld [smem:[%s2]]
  %s4 = scalar_lea.smem %s0, 2
  %s5 = sld [smem:[%s4]]
  %s6 = scalar_lea.smem %s0, 3
  %s7 = sld [smem:[%s6]]
  %s8 = scalar_lea.smem %s0, 4
  %s9 = sld [smem:[%s8]]
  %s10 = scalar_lea.smem %s0, 5
  %s11 = sld [smem:[%s10]]
  %s12 = scalar_lea.smem %s0, 6
  %s13 = sld [smem:[%s12]]
  %s14 = scalar_lea.smem %s0, 7
  %s15 = sld [smem:[%s14]]
  %s16 = scalar_lea.smem %s0, 8
  %s17 = sld [smem:[%s16]]
  %s18 = scalar_lea.smem %s0, 9
  %s19 = sld [smem:[%s18]]
  %s20 = scalar_lea.smem %s0, 10
  %s21 = sld [smem:[%s20]]
  %s22 = scalar_lea.smem %s0, 11
  %s23 = sld [smem:[%s22]]
  %s24 = scalar_lea.smem %s0, 12
  %s25 = sld [smem:[%s24]]
  %s26 = scalar_lea.smem %s0, 13
  %s27 = sld [smem:[%s26]]
  %s28 = scalar_lea.smem %s0, 14
  %s29 = sld [smem:[%s28]]
  %s30 = scalar_lea.smem %s0, 15
  %s31 = sld [smem:[%s30]]
  %s32 = scalar_lea.smem %s0, 16
  %s33 = sld [smem:[%s32]]
  %s34 = scalar_lea.smem %s0, 17
  %s35 = sld [smem:[%s34]]
  %s36 = scalar_lea.smem %s0, 18
  %s37 = sld [smem:[%s36]]
  %s38 = scalar_lea.smem %s0, 19
  %s39 = sld [smem:[%s38]]
  %s40 = scalar_lea.smem %s0, 20
  %s41 = sld [smem:[%s40]]
  %s42 = scalar_lea.smem %s0, 21
  %s43 = sld [smem:[%s42]]
  %s44 = scalar_lea.smem %s0, 22
  %s45 = sld [smem:[%s44]]
  %s46 = scalar_lea.smem %s0, 23
  %s47 = sld [smem:[%s46]]
  %s48 = scalar_lea.smem %s0, 24
  %s49 = sld [smem:[%s48]]
  %s50 = scalar_lea.smem %s0, 25
  %s51 = sld [smem:[%s50]]
  %s52 = scalar_lea.smem %s0, 26
  %s53 = sld [smem:[%s52]]
  %s54 = scalar_lea.smem %s0, 27
  %s55 = sld [smem:[%s54]]
  %s56 = scalar_lea.smem %s0, 28
  %s57 = sld [smem:[%s56]]
  %s58 = scalar_lea.smem %s0, 29
  %s59 = sld [smem:[%s58]]
  %s60 = scalar_lea.smem %s0, 30
  %s61 = sld [smem:[%s60]]
  %s62 = scalar_lea.smem %s0, 31
  %s63 = sld [smem:[%s62]]
  %s64 = sld [smem:[#allocation0]]
  $region134: #{_lambda_.1} parent=0
    _
  %s66 = ssub.s32 1, %s64
  %s67 = scalar_select 0, %s66, %s64
  %v68 = vstv %s61
  %69 = vst [vmem:[#allocation2] sm:$0x1] %v68
  // Predicated region
  $region2: #{_lambda_.1} parent=0 // pred_check
    _
  $region3: #{_lambda_.1} parent=0 // pred_check_branch
    %71 = sbr.rel (0) target = $region5
  $region4: #{_lambda_.1} parent=0 // pred_region
    _
  $region5: #{_lambda_.1} parent=0 // pred_fallthru
    _
  // Predicated region
  $region6: #{_lambda_.1} parent=0 // pred_check
    _
  $region7: #{_lambda_.1} parent=0 // pred_check_branch
    %73 = sbr.rel (0) target = $region9
  $region8: #{_lambda_.1} parent=0 // pred_region
    _
  $region9: #{_lambda_.1} parent=0 // pred_fallthru
    _
  // Predicated region
  $region10: #{_lambda_.1} parent=0 // pred_check
    _
  $region11: #{_lambda_.1} parent=0 // pred_check_branch
    %75 = sbr.rel (0) target = $region13
  $region12: #{_lambda_.1} parent=0 // pred_region
    _
  $region13: #{_lambda_.1} parent=0 // pred_fallthru
    _
  // Predicated region
  $region14: #{_lambda_.1} parent=0 // pred_check
    _
  $region15: #{_lambda_.1} parent=0 // pred_check_branch
    %77 = sbr.rel (0) target = $region17
  $region16: #{_lambda_.1} parent=0 // pred_region
    _
  $region17: #{_lambda_.1} parent=0 // pred_fallthru
    _
  // Predicated region
  $region18: #{_lambda_.1} parent=0 // pred_check
    _
  $region19: #{_lambda_.1} parent=0 // pred_check_branch
    %79 = sbr.rel (0) target = $region21
  $region20: #{_lambda_.1} parent=0 // pred_region
    _
  $region21: #{_lambda_.1} parent=0 // pred_fallthru
    _
  // Predicated region
  $region22: #{_lambda_.1} parent=0 // pred_check
    _
  $region23: #{_lambda_.1} parent=0 // pred_check_branch
    %81 = sbr.rel (0) target = $region25
  $region24: #{_lambda_.1} parent=0 // pred_region
    _
  $region25: #{_lambda_.1} parent=0 // pred_fallthru
    _
  // Predicated region
  $region26: #{_lambda_.1} parent=0 // pred_check
    _
  $region27: #{_lambda_.1} parent=0 // pred_check_branch
    %83 = sbr.rel (0) target = $region29
  $region28: #{_lambda_.1} parent=0 // pred_region
    _
  $region29: #{_lambda_.1} parent=0 // pred_fallthru
    _
  // Predicated region
  $region30: #{_lambda_.1} parent=0 // pred_check
    _
  $region31: #{_lambda_.1} parent=0 // pred_check_branch
    %85 = sbr.rel (0) target = $region33
  $region32: #{_lambda_.1} parent=0 // pred_region
    _
  $region33: #{_lambda_.1} parent=0 // pred_fallthru
    _
  // Predicated region
  $region34: #{_lambda_.1} parent=0 // pred_check
    _
  $region35: #{_lambda_.1} parent=0 // pred_check_branch
    %87 = sbr.rel (0) target = $region37
  $region36: #{_lambda_.1} parent=0 // pred_region
    _
  $region37: #{_lambda_.1} parent=0 // pred_fallthru
    _
  // Predicated region
  $region38: #{_lambda_.1} parent=0 // pred_check
    _
  $region39: #{_lambda_.1} parent=0 // pred_check_branch
    %89 = sbr.rel (0) target = $region41
  $region40: #{_lambda_.1} parent=0 // pred_region
    _
  $region41: #{_lambda_.1} parent=0 // pred_fallthru
    _
  // Predicated region
  $region42: #{_lambda_.1} parent=0 // pred_check
    _
  $region43: #{_lambda_.1} parent=0 // pred_check_branch
    %91 = sbr.rel (0) target = $region45
  $region44: #{_lambda_.1} parent=0 // pred_region
    _
  $region45: #{_lambda_.1} parent=0 // pred_fallthru
    _
  // Predicated region
  $region46: #{_lambda_.1} parent=0 // pred_check
    _
  $region47: #{_lambda_.1} parent=0 // pred_check_branch
    %93 = sbr.rel (0) target = $region49
  $region48: #{_lambda_.1} parent=0 // pred_region
    _
  $region49: #{_lambda_.1} parent=0 // pred_fallthru
    _
  // Predicated region
  $region50: #{_lambda_.1} parent=0 // pred_check
    _
  $region51: #{_lambda_.1} parent=0 // pred_check_branch
    %95 = sbr.rel (0) target = $region53
  $region52: #{_lambda_.1} parent=0 // pred_region
    _
  $region53: #{_lambda_.1} parent=0 // pred_fallthru
    _
  // Predicated region
  $region54: #{_lambda_.1} parent=0 // pred_check
    _
  $region55: #{_lambda_.1} parent=0 // pred_check_branch
    %97 = sbr.rel (0) target = $region57
  $region56: #{_lambda_.1} parent=0 // pred_region
    _
  $region57: #{_lambda_.1} parent=0 // pred_fallthru
    _
  // Predicated region
  $region58: #{_lambda_.1} parent=0 // pred_check
    _
  $region59: #{_lambda_.1} parent=0 // pred_check_branch
    %99 = sbr.rel (0) target = $region61
  $region60: #{_lambda_.1} parent=0 // pred_region
    _
  $region61: #{_lambda_.1} parent=0 // pred_fallthru
    _
  // Predicated region
  $region62: #{_lambda_.1} parent=0 // pred_check
    _
  $region63: #{_lambda_.1} parent=0 // pred_check_branch
    %101 = sbr.rel (0) target = $region65
  $region64: #{_lambda_.1} parent=0 // pred_region
    _
  $region65: #{_lambda_.1} parent=0 // pred_fallthru
    _
  // Predicated region
  $region66: #{_lambda_.1} parent=0 // pred_check
    _
  $region67: #{_lambda_.1} parent=0 // pred_check_branch
    %103 = sbr.rel (0) target = $region69
  $region68: #{_lambda_.1} parent=0 // pred_region
    _
  $region69: #{_lambda_.1} parent=0 // pred_fallthru
    _
  // Predicated region
  $region70: #{_lambda_.1} parent=0 // pred_check
    _
  $region71: #{_lambda_.1} parent=0 // pred_check_branch
    %105 = sbr.rel (0) target = $region73
  $region72: #{_lambda_.1} parent=0 // pred_region
    _
  $region73: #{_lambda_.1} parent=0 // pred_fallthru
    _
  // Predicated region
  $region74: #{_lambda_.1} parent=0 // pred_check
    _
  $region75: #{_lambda_.1} parent=0 // pred_check_branch
    %107 = sbr.rel (0) target = $region77
  $region76: #{_lambda_.1} parent=0 // pred_region
    _
  $region77: #{_lambda_.1} parent=0 // pred_fallthru
    _
  // Predicated region
  $region78: #{_lambda_.1} parent=0 // pred_check
    _
  $region79: #{_lambda_.1} parent=0 // pred_check_branch
    %109 = sbr.rel (0) target = $region81
  $region80: #{_lambda_.1} parent=0 // pred_region
    _
  $region81: #{_lambda_.1} parent=0 // pred_fallthru
    _
  // Predicated region
  $region82: #{_lambda_.1} parent=0 // pred_check
    _
  $region83: #{_lambda_.1} parent=0 // pred_check_branch
    %111 = sbr.rel (0) target = $region85
  $region84: #{_lambda_.1} parent=0 // pred_region
    _
  $region85: #{_lambda_.1} parent=0 // pred_fallthru
    _
  // Predicated region
  $region86: #{_lambda_.1} parent=0 // pred_check
    _
  $region87: #{_lambda_.1} parent=0 // pred_check_branch
    %113 = sbr.rel (0) target = $region89
  $region88: #{_lambda_.1} parent=0 // pred_region
    _
  $region89: #{_lambda_.1} parent=0 // pred_fallthru
    _
  // Predicated region
  $region90: #{_lambda_.1} parent=0 // pred_check
    _
  $region91: #{_lambda_.1} parent=0 // pred_check_branch
    %115 = sbr.rel (0) target = $region93
  $region92: #{_lambda_.1} parent=0 // pred_region
    _
  $region93: #{_lambda_.1} parent=0 // pred_fallthru
    _
  // Predicated region
  $region94: #{_lambda_.1} parent=0 // pred_check
    _
  $region95: #{_lambda_.1} parent=0 // pred_check_branch
    %117 = sbr.rel (0) target = $region97
  $region96: #{_lambda_.1} parent=0 // pred_region
    _
  $region97: #{_lambda_.1} parent=0 // pred_fallthru
    _
  // Predicated region
  $region98: #{_lambda_.1} parent=0 // pred_check
    _
  $region99: #{_lambda_.1} parent=0 // pred_check_branch
    %119 = sbr.rel (0) target = $region101
  $region100: #{_lambda_.1} parent=0 // pred_region
    _
  $region101: #{_lambda_.1} parent=0 // pred_fallthru
    _
  // Predicated region
  $region102: #{_lambda_.1} parent=0 // pred_check
    _
  $region103: #{_lambda_.1} parent=0 // pred_check_branch
    %121 = sbr.rel (0) target = $region105
  $region104: #{_lambda_.1} parent=0 // pred_region
    _
  $region105: #{_lambda_.1} parent=0 // pred_fallthru
    _
  // Predicated region
  $region106: #{_lambda_.1} parent=0 // pred_check
    _
  $region107: #{_lambda_.1} parent=0 // pred_check_branch
    %123 = sbr.rel (0) target = $region109
  $region108: #{_lambda_.1} parent=0 // pred_region
    _
  $region109: #{_lambda_.1} parent=0 // pred_fallthru
    _
  // Predicated region
  $region110: #{_lambda_.1} parent=0 // pred_check
    _
  $region111: #{_lambda_.1} parent=0 // pred_check_branch
    %125 = sbr.rel (0) target = $region113
  $region112: #{_lambda_.1} parent=0 // pred_region
    _
  $region113: #{_lambda_.1} parent=0 // pred_fallthru
    _
  // Predicated region
  $region114: #{_lambda_.1} parent=0 // pred_check
    _
  $region115: #{_lambda_.1} parent=0 // pred_check_branch
    %127 = sbr.rel (0) target = $region117
  $region116: #{_lambda_.1} parent=0 // pred_region
    _
  $region117: #{_lambda_.1} parent=0 // pred_fallthru
    _
  // Predicated region
  $region118: #{_lambda_.1} parent=0 // pred_check
    _
  $region119: #{_lambda_.1} parent=0 // pred_check_branch
    %129 = sbr.rel (0) target = $region121
  $region120: #{_lambda_.1} parent=0 // pred_region
    _
  $region121: #{_lambda_.1} parent=0 // pred_fallthru
    _
  // Predicated region
  $region122: #{_lambda_.1} parent=0 // pred_check
    _
  $region123: #{_lambda_.1} parent=0 // pred_check_branch
    %131 = sbr.rel (0) target = $region125
  $region124: #{_lambda_.1} parent=0 // pred_region
    _
  $region125: #{_lambda_.1} parent=0 // pred_fallthru
    _
  %v132 = vld [vmem:[%s3] sm:$0xff]
  %v133 = vld [vmem:[%s3 + $0x8] sm:$0xff]
  %v134 = vld [vmem:[%s3 + $0x10] sm:$0xff]
  %v135 = vld [vmem:[%s3 + $0x18] sm:$0xff]
  %v136 = vld [vmem:[%s7] sm:$0x1]
  %138 = vset.pattern.permute.xlu0 0
  %139 = vperm.xlu0 %138, %v132
  %v140 = vpop.permute.xlu0 %139
  %143 = vset.pattern.permute.xlu0 0
  %144 = vperm.xlu0 %143, %v133
  %v145 = vpop.permute.xlu0 %144
  %148 = vset.pattern.permute.xlu0 0
  %149 = vperm.xlu0 %148, %v134
  %v150 = vpop.permute.xlu0 %149
  %153 = vset.pattern.permute.xlu0 0
  %154 = vperm.xlu0 %153, %v135
  %v155 = vpop.permute.xlu0 %154
  %v158 = vperm.slane %v136, 0
  %v160 = vmul.f32 %v140, %v158
  %v161 = vmul.f32 %v145, %v158
  %v162 = vmul.f32 %v150, %v158
  %v163 = vmul.f32 %v155, %v158
  %v164 = vld [vmem:[%s9] sm:$0x1]
  %v166 = vperm.slane %v164, 0
  %167 = vrot.lane.b32.xlu0 %v166, 16
  %v168 = vpop.permute.xlu0 %167
  %v170 = vadd.f32 %v160, %v168
  %v171 = vadd.f32 %v161, %v168
  %v172 = vadd.f32 %v162, %v168
  %v173 = vadd.f32 %v163, %v168
  %vm178 = vcmask 1041408
  %v179 = vrot.slane %v160, 6
  %v180 = vrot.slane %v161, 6
  %v181 = vsel %vm178, %v179, %v180
  %v182 = vrot.slane %v162, 6
  %v183 = vrot.slane %v163, 6
  %v184 = vsel %vm178, %v182, %v183
  %v187 = vsel %vm178, 0.0, %v179
  %v188 = vsel %vm178, 0.0, %v182
  %191 = vrot.lane.b32.xlu0 %v187, 16
  %v192 = vpop.permute.xlu0 %191
  %193 = vrot.lane.b32.xlu0 %v181, 16
  %v194 = vpop.permute.xlu0 %193
  %195 = vrot.lane.b32.xlu0 %v188, 16
  %v196 = vpop.permute.xlu0 %195
  %197 = vrot.lane.b32.xlu0 %v184, 16
  %v198 = vpop.permute.xlu0 %197
  %v203 = vadd.f32 %v170, %v192
  %v204 = vadd.f32 %v171, %v194
  %v205 = vadd.f32 %v172, %v196
  %v206 = vadd.f32 %v173, %v198
  %vm207 = vcmask 1040384
  %v208 = vrot.slane %v160, 7
  %v209 = vrot.slane %v161, 7
  %v210 = vsel %vm207, %v208, %v209
  %v211 = vrot.slane %v162, 7
  %v212 = vrot.slane %v163, 7
  %v213 = vsel %vm207, %v211, %v212
  %214 = vrot.lane.b32.xlu0 %v208, 120
  %v215 = vpop.permute.xlu0 %214
  %216 = vrot.lane.b32.xlu0 %v210, 120
  %v217 = vpop.permute.xlu0 %216
  %218 = vrot.lane.b32.xlu0 %v211, 120
  %v219 = vpop.permute.xlu0 %218
  %220 = vrot.lane.b32.xlu0 %v213, 120
  %v221 = vpop.permute.xlu0 %220
  %v224 = vsel %vm207, 0.0, %v215
  %v225 = vsel %vm207, 0.0, %v219
  %228 = vrot.lane.b32.xlu0 %v224, 16
  %v229 = vpop.permute.xlu0 %228
  %230 = vrot.lane.b32.xlu0 %v217, 16
  %v231 = vpop.permute.xlu0 %230
  %232 = vrot.lane.b32.xlu0 %v225, 16
  %v233 = vpop.permute.xlu0 %232
  %234 = vrot.lane.b32.xlu0 %v221, 16
  %v235 = vpop.permute.xlu0 %234
  %v240 = vadd.f32 %v203, %v229
  %v241 = vadd.f32 %v204, %v231
  %v242 = vadd.f32 %v205, %v233
  %v243 = vadd.f32 %v206, %v235
  %v244 = vld [vmem:[%s11] sm:$0x1]
  %v246 = vperm.slane %v244, 0
  %247 = vrot.lane.b32.xlu0 %v246, 24
  %v248 = vpop.permute.xlu0 %247
  %v250 = vadd.f32 %v160, %v248
  %v251 = vadd.f32 %v161, %v248
  %v252 = vadd.f32 %v162, %v248
  %v253 = vadd.f32 %v163, %v248
  %v254 = vmax.f32 %v240, 0.0
  %v255 = vmax.f32 %v241, 0.0
  %v256 = vmax.f32 %v242, 0.0
  %v257 = vmax.f32 %v243, 0.0
  %v258 = vld [vmem:[%s13] sm:$0xff]
  %263 = vrot.lane.b32.xlu0 %v254, 112
  %v264 = vpop.permute.xlu0 %263
  %265 = vrot.lane.b32.xlu0 %v255, 112
  %v266 = vpop.permute.xlu0 %265
  %267 = vrot.lane.b32.xlu0 %v256, 112
  %v268 = vpop.permute.xlu0 %267
  %269 = vrot.lane.b32.xlu0 %v257, 112
  %v270 = vpop.permute.xlu0 %269
  %vm271 = vcmask 64512
  %v272 = vsel %vm271, %v264, 0
  %v274 = vsel %vm271, %v266, 0
  %v276 = vsel %vm271, %v268, 0
  %v278 = vsel %vm271, %v270, 0
  %280 = vmatpush.msra.mxu0 0.0
  %281 = vmatpush.msra.mxu0 0.0
  %282 = vmatpush.msra.mxu0 0.0
  %283 = vmatpush.msra.mxu0 0.0
  %284 = vmatpush.msra.mxu0 0.0
  %285 = vmatpush.msra.mxu0 0.0
  %286 = vmatpush.msra.mxu0 0.0
  %287 = vmatpush.msra.mxu0 0.0
  %288 = vmatpush.msra.mxu0 0.0
  %289 = vmatpush.msra.mxu0 0.0
  %290 = vmatpush.msra.mxu0 0.0
  %291 = vmatpush.msra.mxu0 0.0
  %292 = vmatpush.msra.mxu0 0.0
  %293 = vmatpush.msra.mxu0 0.0
  %294 = vmatpush.msra.mxu0 0.0
  %295 = vmatpush.msra.mxu0 %v258
  %296 = vmatmul.f32.gmra.mxu0 %v272
  %v297 = vpop.f32.mrf.mxu0
  %v298 = vadd.f32 0.0, %v297
  %299 = vmatmul.f32.gmra.mxu0 %v274
  %v300 = vpop.f32.mrf.mxu0
  %v301 = vadd.f32 0.0, %v300
  %302 = vmatmul.f32.gmra.mxu0 %v276
  %v303 = vpop.f32.mrf.mxu0
  %v304 = vadd.f32 0.0, %v303
  %305 = vmatmul.f32.gmra.mxu0 %v278
  %v306 = vpop.f32.mrf.mxu0
  %v307 = vadd.f32 0.0, %v306
  %308 = vdwg.mxu0
  %v309 = vld [vmem:[%s15] sm:$0x1]
  %v311 = vperm.slane %v309, 0
  %312 = vrot.lane.b32.xlu0 %v311, 16
  %v313 = vpop.permute.xlu0 %312
  %v315 = vadd.f32 %v298, %v313
  %v316 = vadd.f32 %v301, %v313
  %v317 = vadd.f32 %v304, %v313
  %v318 = vadd.f32 %v307, %v313
  %v323 = vrot.slane %v298, 6
  %v324 = vrot.slane %v301, 6
  %v325 = vsel %vm178, %v323, %v324
  %v326 = vrot.slane %v304, 6
  %v327 = vrot.slane %v307, 6
  %v328 = vsel %vm178, %v326, %v327
  %v331 = vsel %vm178, 0.0, %v323
  %v332 = vsel %vm178, 0.0, %v326
  %335 = vrot.lane.b32.xlu0 %v331, 16
  %v336 = vpop.permute.xlu0 %335
  %337 = vrot.lane.b32.xlu0 %v325, 16
  %v338 = vpop.permute.xlu0 %337
  %339 = vrot.lane.b32.xlu0 %v332, 16
  %v340 = vpop.permute.xlu0 %339
  %341 = vrot.lane.b32.xlu0 %v328, 16
  %v342 = vpop.permute.xlu0 %341
  %v347 = vadd.f32 %v315, %v336
  %v348 = vadd.f32 %v316, %v338
  %v349 = vadd.f32 %v317, %v340
  %v350 = vadd.f32 %v318, %v342
  %v351 = vrot.slane %v298, 7
  %v352 = vrot.slane %v301, 7
  %v353 = vsel %vm207, %v351, %v352
  %v354 = vrot.slane %v304, 7
  %v355 = vrot.slane %v307, 7
  %v356 = vsel %vm207, %v354, %v355
  %357 = vrot.lane.b32.xlu0 %v351, 120
  %v358 = vpop.permute.xlu0 %357
  %359 = vrot.lane.b32.xlu0 %v353, 120
  %v360 = vpop.permute.xlu0 %359
  %361 = vrot.lane.b32.xlu0 %v354, 120
  %v362 = vpop.permute.xlu0 %361
  %363 = vrot.lane.b32.xlu0 %v356, 120
  %v364 = vpop.permute.xlu0 %363
  %v367 = vsel %vm207, 0.0, %v358
  %v368 = vsel %vm207, 0.0, %v362
  %371 = vrot.lane.b32.xlu0 %v367, 16
  %v372 = vpop.permute.xlu0 %371
  %373 = vrot.lane.b32.xlu0 %v360, 16
  %v374 = vpop.permute.xlu0 %373
  %375 = vrot.lane.b32.xlu0 %v368, 16
  %v376 = vpop.permute.xlu0 %375
  %377 = vrot.lane.b32.xlu0 %v364, 16
  %v378 = vpop.permute.xlu0 %377
  %v383 = vadd.f32 %v347, %v372
  %v384 = vadd.f32 %v348, %v374
  %v385 = vadd.f32 %v349, %v376
  %v386 = vadd.f32 %v350, %v378
  %v387 = vmax.f32 %v383, 0.0
  %v388 = vmax.f32 %v384, 0.0
  %v389 = vmax.f32 %v385, 0.0
  %v390 = vmax.f32 %v386, 0.0
  %395 = vrot.lane.b32.xlu0 %v250, 120
  %v396 = vpop.permute.xlu0 %395
  %397 = vrot.lane.b32.xlu0 %v251, 120
  %v398 = vpop.permute.xlu0 %397
  %399 = vrot.lane.b32.xlu0 %v252, 120
  %v400 = vpop.permute.xlu0 %399
  %401 = vrot.lane.b32.xlu0 %v253, 120
  %v402 = vpop.permute.xlu0 %401
  %v407 = vadd.f32 %v387, %v396
  %v408 = vadd.f32 %v388, %v398
  %v409 = vadd.f32 %v389, %v400
  %v410 = vadd.f32 %v390, %v402
  %v411 = vmax.f32 %v407, 0.0
  %v412 = vmax.f32 %v408, 0.0
  %v413 = vmax.f32 %v409, 0.0
  %v414 = vmax.f32 %v410, 0.0
  %vm415 = vcmask 195712
  %v416 = vsel %vm415, %v411, 0.0
  %v417 = vsel %vm415, %v412, 0.0
  %v418 = vadd.f32 %v416, %v417
  %v419 = vrot.slane %v418, 4
  %v420 = vadd.f32 %v418, %v419
  %v421 = vrot.slane %v420, 2
  %v422 = vadd.f32 %v420, %v421
  %v423 = vrot.slane %v422, 1
  %v424 = vadd.f32 %v422, %v423
  %v425 = vsel %vm415, %v413, 0.0
  %v426 = vsel %vm415, %v414, 0.0
  %v427 = vadd.f32 %v425, %v426
  %v428 = vrot.slane %v427, 4
  %v429 = vadd.f32 %v427, %v428
  %v430 = vrot.slane %v429, 2
  %v431 = vadd.f32 %v429, %v430
  %v432 = vrot.slane %v431, 1
  %v433 = vadd.f32 %v431, %v432
  %v434 = vrcp.pop 16.0
  %v435 = vmul.f32 16.0, %v434
  %v436 = vsub.f32 1.0, %v435
  %v437 = vmul.f32 %v434, %v436
  %v438 = vadd.f32 %v434, %v437
  %vm439 = vweird.f32 %v434
  %v440 = vsel %vm439, %v434, %v438
  %v441 = vmul.f32 %v424, %v440
  %v442 = vmul.f32 %v433, %v440
  %v443 = vld [vmem:[%s17] sm:$0xff]
  %v444 = vld [vmem:[%s17 + $0x8] sm:$0xff]
  %v445 = vld [vmem:[%s17 + $0x10] sm:$0xff]
  %v446 = vld [vmem:[%s17 + $0x18] sm:$0xff]
  %451 = vrot.lane.b32.xlu0 %v411, 112
  %v452 = vpop.permute.xlu0 %451
  %453 = vrot.lane.b32.xlu0 %v412, 112
  %v454 = vpop.permute.xlu0 %453
  %455 = vrot.lane.b32.xlu0 %v413, 112
  %v456 = vpop.permute.xlu0 %455
  %457 = vrot.lane.b32.xlu0 %v414, 112
  %v458 = vpop.permute.xlu0 %457
  %vm463 = vcmask 261120
  %v465 = vsel %vm463, %v443, 0
  %v468 = vsel %vm463, %v444, 0
  %v471 = vsel %vm463, %v445, 0
  %v474 = vsel %vm463, %v446, 0
  %476 = vmatpush.msra.mxu0 0.0
  %477 = vmatpush.msra.mxu0 0.0
  %478 = vmatpush.msra.mxu0 0.0
  %479 = vmatpush.msra.mxu0 0.0
  %480 = vmatpush.msra.mxu0 0.0
  %481 = vmatpush.msra.mxu0 0.0
  %482 = vmatpush.msra.mxu0 0.0
  %483 = vmatpush.msra.mxu0 0.0
  %484 = vmatpush.msra.mxu0 0.0
  %485 = vmatpush.msra.mxu0 0.0
  %486 = vmatpush.msra.mxu0 0.0
  %487 = vmatpush.msra.mxu0 0.0
  %488 = vmatpush.msra.mxu0 %v458
  %489 = vmatpush.msra.mxu0 %v456
  %490 = vmatpush.msra.mxu0 %v454
  %491 = vmatpush.msra.mxu0 %v452
  %492 = vmatmul.f32.gmra.mxu0 %v465
  %v493 = vpop.f32.mrf.mxu0
  %v494 = vadd.f32 0.0, %v493
  %495 = vmatmul.f32.gmra.mxu0 %v468
  %v496 = vpop.f32.mrf.mxu0
  %v497 = vadd.f32 0.0, %v496
  %498 = vmatmul.f32.gmra.mxu0 %v471
  %v499 = vpop.f32.mrf.mxu0
  %v500 = vadd.f32 0.0, %v499
  %501 = vmatmul.f32.gmra.mxu0 %v474
  %v502 = vpop.f32.mrf.mxu0
  %v503 = vadd.f32 0.0, %v502
  %504 = vdwg.mxu0
  %v505 = vmax.f32 %v494, %v500
  %v506 = vmax.f32 %v497, %v503
  %v507 = vld [vmem:[%s19] sm:$0xff]
  %v509 = vsel %vm271, %v505, 0
  %v512 = vsel %vm271, %v506, 0
  %514 = vmatpush.msra.mxu0 0.0
  %515 = vmatpush.msra.mxu0 0.0
  %516 = vmatpush.msra.mxu0 0.0
  %517 = vmatpush.msra.mxu0 0.0
  %518 = vmatpush.msra.mxu0 0.0
  %519 = vmatpush.msra.mxu0 0.0
  %520 = vmatpush.msra.mxu0 0.0
  %521 = vmatpush.msra.mxu0 0.0
  %522 = vmatpush.msra.mxu0 0.0
  %523 = vmatpush.msra.mxu0 0.0
  %524 = vmatpush.msra.mxu0 0.0
  %525 = vmatpush.msra.mxu0 0.0
  %526 = vmatpush.msra.mxu0 0.0
  %527 = vmatpush.msra.mxu0 0.0
  %528 = vmatpush.msra.mxu0 0.0
  %529 = vmatpush.msra.mxu0 %v507
  %530 = vmatmul.f32.gmra.mxu0 %v509
  %v531 = vpop.f32.mrf.mxu0
  %v532 = vadd.f32 0.0, %v531
  %533 = vmatmul.f32.gmra.mxu0 %v512
  %v534 = vpop.f32.mrf.mxu0
  %v535 = vadd.f32 0.0, %v534
  %536 = vdwg.mxu0
  %v537 = vld [vmem:[%s21] sm:$0x1]
  %v539 = vperm.slane %v537, 0
  %540 = vrot.lane.b32.xlu0 %v539, 16
  %v541 = vpop.permute.xlu0 %540
  %v543 = vadd.f32 %v532, %v541
  %v544 = vadd.f32 %v535, %v541
  %v547 = vrot.slane %v532, 4
  %v548 = vrot.slane %v535, 4
  %vm551 = vcmask 1043456
  %v552 = vsel %vm551, 0.0, %v547
  %v553 = vsel %vm551, 0.0, %v548
  %556 = vrot.lane.b32.xlu0 %v552, 16
  %v557 = vpop.permute.xlu0 %556
  %558 = vrot.lane.b32.xlu0 %v553, 16
  %v559 = vpop.permute.xlu0 %558
  %v562 = vadd.f32 %v543, %v557
  %v563 = vadd.f32 %v544, %v559
  %v564 = vrot.slane %v532, 6
  %v565 = vrot.slane %v535, 6
  %566 = vrot.lane.b32.xlu0 %v564, 120
  %v567 = vpop.permute.xlu0 %566
  %568 = vrot.lane.b32.xlu0 %v565, 120
  %v569 = vpop.permute.xlu0 %568
  %v572 = vsel %vm178, 0.0, %v567
  %v573 = vsel %vm178, 0.0, %v569
  %576 = vrot.lane.b32.xlu0 %v572, 16
  %v577 = vpop.permute.xlu0 %576
  %578 = vrot.lane.b32.xlu0 %v573, 16
  %v579 = vpop.permute.xlu0 %578
  %v582 = vadd.f32 %v562, %v577
  %v583 = vadd.f32 %v563, %v579
  %v584 = vmax.f32 %v582, 0.0
  %v585 = vmax.f32 %v583, 0.0
  %v586 = vld [vmem:[%s23] sm:$0xff]
  %589 = vrot.lane.b32.xlu0 %v584, 112
  %v590 = vpop.permute.xlu0 %589
  %591 = vrot.lane.b32.xlu0 %v585, 112
  %v592 = vpop.permute.xlu0 %591
  %v593 = vsel %vm271, %v590, 0
  %v595 = vsel %vm271, %v592, 0
  %597 = vmatpush.msra.mxu0 0.0
  %598 = vmatpush.msra.mxu0 0.0
  %599 = vmatpush.msra.mxu0 0.0
  %600 = vmatpush.msra.mxu0 0.0
  %601 = vmatpush.msra.mxu0 0.0
  %602 = vmatpush.msra.mxu0 0.0
  %603 = vmatpush.msra.mxu0 0.0
  %604 = vmatpush.msra.mxu0 0.0
  %605 = vmatpush.msra.mxu0 0.0
  %606 = vmatpush.msra.mxu0 0.0
  %607 = vmatpush.msra.mxu0 0.0
  %608 = vmatpush.msra.mxu0 0.0
  %609 = vmatpush.msra.mxu0 0.0
  %610 = vmatpush.msra.mxu0 0.0
  %611 = vmatpush.msra.mxu0 0.0
  %612 = vmatpush.msra.mxu0 %v586
  %613 = vmatmul.f32.gmra.mxu0 %v593
  %v614 = vpop.f32.mrf.mxu0
  %v615 = vadd.f32 0.0, %v614
  %616 = vmatmul.f32.gmra.mxu0 %v595
  %v617 = vpop.f32.mrf.mxu0
  %v618 = vadd.f32 0.0, %v617
  %619 = vdwg.mxu0
  %v620 = vld [vmem:[%s25] sm:$0x1]
  %v622 = vperm.slane %v620, 0
  %623 = vrot.lane.b32.xlu0 %v622, 16
  %v624 = vpop.permute.xlu0 %623
  %v626 = vadd.f32 %v615, %v624
  %v627 = vadd.f32 %v618, %v624
  %v630 = vrot.slane %v615, 4
  %v631 = vrot.slane %v618, 4
  %v634 = vsel %vm551, 0.0, %v630
  %v635 = vsel %vm551, 0.0, %v631
  %638 = vrot.lane.b32.xlu0 %v634, 16
  %v639 = vpop.permute.xlu0 %638
  %640 = vrot.lane.b32.xlu0 %v635, 16
  %v641 = vpop.permute.xlu0 %640
  %v644 = vadd.f32 %v626, %v639
  %v645 = vadd.f32 %v627, %v641
  %v646 = vrot.slane %v615, 6
  %v647 = vrot.slane %v618, 6
  %648 = vrot.lane.b32.xlu0 %v646, 120
  %v649 = vpop.permute.xlu0 %648
  %650 = vrot.lane.b32.xlu0 %v647, 120
  %v651 = vpop.permute.xlu0 %650
  %v654 = vsel %vm178, 0.0, %v649
  %v655 = vsel %vm178, 0.0, %v651
  %658 = vrot.lane.b32.xlu0 %v654, 16
  %v659 = vpop.permute.xlu0 %658
  %660 = vrot.lane.b32.xlu0 %v655, 16
  %v661 = vpop.permute.xlu0 %660
  %v664 = vadd.f32 %v644, %v659
  %v665 = vadd.f32 %v645, %v661
  %v666 = vmax.f32 %v664, 0.0
  %v667 = vmax.f32 %v665, 0.0
  %668 = vrot.lane.b32.xlu0 %v505, 16
  %v669 = vpop.permute.xlu0 %668
  %670 = vrot.lane.b32.xlu0 %v506, 16
  %v671 = vpop.permute.xlu0 %670
  %v674 = vadd.f32 %v666, %v669
  %v675 = vadd.f32 %v667, %v671
  %v676 = vmax.f32 %v674, 0.0
  %v677 = vmax.f32 %v675, 0.0
  %v678 = vsel %vm415, %v676, 0.0
  %v679 = vrot.slane %v678, 4
  %v680 = vadd.f32 %v678, %v679
  %v681 = vrot.slane %v680, 2
  %v682 = vadd.f32 %v680, %v681
  %v683 = vrot.slane %v682, 1
  %v684 = vadd.f32 %v682, %v683
  %v685 = vsel %vm415, %v677, 0.0
  %v686 = vrot.slane %v685, 4
  %v687 = vadd.f32 %v685, %v686
  %v688 = vrot.slane %v687, 2
  %v689 = vadd.f32 %v687, %v688
  %v690 = vrot.slane %v689, 1
  %v691 = vadd.f32 %v689, %v690
  %v692 = vrcp.pop 8.0
  %v693 = vmul.f32 8.0, %v692
  %v694 = vsub.f32 1.0, %v693
  %v695 = vmul.f32 %v692, %v694
  %v696 = vadd.f32 %v692, %v695
  %vm697 = vweird.f32 %v692
  %v698 = vsel %vm697, %v692, %v696
  %v699 = vmul.f32 %v684, %v698
  %v700 = vmul.f32 %v691, %v698
  %v701 = vld [vmem:[%s27] sm:$0xff]
  %v702 = vld [vmem:[%s27 + $0x8] sm:$0xff]
  %705 = vrot.lane.b32.xlu0 %v676, 112
  %v706 = vpop.permute.xlu0 %705
  %707 = vrot.lane.b32.xlu0 %v677, 112
  %v708 = vpop.permute.xlu0 %707
  %vm711 = vcmask 130048
  %v713 = vsel %vm711, %v701, 0
  %v716 = vsel %vm711, %v702, 0
  %718 = vmatpush.msra.mxu0 0.0
  %719 = vmatpush.msra.mxu0 0.0
  %720 = vmatpush.msra.mxu0 0.0
  %721 = vmatpush.msra.mxu0 0.0
  %722 = vmatpush.msra.mxu0 0.0
  %723 = vmatpush.msra.mxu0 0.0
  %724 = vmatpush.msra.mxu0 0.0
  %725 = vmatpush.msra.mxu0 0.0
  %726 = vmatpush.msra.mxu0 0.0
  %727 = vmatpush.msra.mxu0 0.0
  %728 = vmatpush.msra.mxu0 0.0
  %729 = vmatpush.msra.mxu0 0.0
  %730 = vmatpush.msra.mxu0 0.0
  %731 = vmatpush.msra.mxu0 0.0
  %732 = vmatpush.msra.mxu0 %v708
  %733 = vmatpush.msra.mxu0 %v706
  %734 = vmatmul.f32.gmra.mxu0 %v713
  %v735 = vpop.f32.mrf.mxu0
  %v736 = vadd.f32 0.0, %v735
  %737 = vmatmul.f32.gmra.mxu0 %v716
  %v738 = vpop.f32.mrf.mxu0
  %v739 = vadd.f32 0.0, %v738
  %740 = vdwg.mxu0
  %v741 = vmax.f32 %v736, %v739
  %v742 = vld [vmem:[%s29] sm:$0xff]
  %v744 = vsel %vm271, %v741, 0
  %746 = vmatpush.msra.mxu0 0.0
  %747 = vmatpush.msra.mxu0 0.0
  %748 = vmatpush.msra.mxu0 0.0
  %749 = vmatpush.msra.mxu0 0.0
  %750 = vmatpush.msra.mxu0 0.0
  %751 = vmatpush.msra.mxu0 0.0
  %752 = vmatpush.msra.mxu0 0.0
  %753 = vmatpush.msra.mxu0 0.0
  %754 = vmatpush.msra.mxu0 0.0
  %755 = vmatpush.msra.mxu0 0.0
  %756 = vmatpush.msra.mxu0 0.0
  %757 = vmatpush.msra.mxu0 0.0
  %758 = vmatpush.msra.mxu0 0.0
  %759 = vmatpush.msra.mxu0 0.0
  %760 = vmatpush.msra.mxu0 0.0
  %761 = vmatpush.msra.mxu0 %v742
  %762 = vmatmul.f32.gmra.mxu0 %v744
  %v763 = vpop.f32.mrf.mxu0
  %v764 = vadd.f32 0.0, %v763
  %765 = vdwg.mxu0
  %v766 = vld [vmem:[%s31] sm:$0x1]
  %v768 = vperm.slane %v766, 0
  %769 = vrot.lane.b32.xlu0 %v768, 32
  %v770 = vpop.permute.xlu0 %769
  %v772 = vadd.f32 %v764, %v770
  %v774 = vrot.slane %v772, 4
  %v776 = vld [vmem:[%s33] sm:$0x1]
  %v778 = vperm.slane %v776, 0
  %779 = vrot.lane.b32.xlu0 %v778, 48
  %v780 = vpop.permute.xlu0 %779
  %v782 = vadd.f32 %v764, %v780
  %v784 = vrot.slane %v782, 4
  %v785 = vmax.f32 %v772, 0.0
  %v786 = vmax.f32 %v774, 0.0
  %v787 = vld [vmem:[%s35] sm:$0xff]
  %v788 = vld [vmem:[%s35 + $0x8] sm:$0xff]
  %791 = vst [vmem:[#allocation1] ss:$2 sm:$0xff] %v785
  %s792 = scalar_lea.vmem [#allocation1], 1
  %793 = vst [vmem:[%s792] ss:$2 sm:$0xff] %v786
  %v794 = vld.sshfl [vmem:[#allocation1] sm:$0xff pattern:$0x75316420]
  %795 = vrot.lane.b32.xlu0 %v794, 96
  %v796 = vpop.permute.xlu0 %795
  %v797 = vsel %vm711, %v796, 0
  %799 = vmatpush.msra.mxu0 0.0
  %800 = vmatpush.msra.mxu0 0.0
  %801 = vmatpush.msra.mxu0 0.0
  %802 = vmatpush.msra.mxu0 0.0
  %803 = vmatpush.msra.mxu0 0.0
  %804 = vmatpush.msra.mxu0 0.0
  %805 = vmatpush.msra.mxu0 0.0
  %806 = vmatpush.msra.mxu0 0.0
  %807 = vmatpush.msra.mxu0 0.0
  %808 = vmatpush.msra.mxu0 0.0
  %809 = vmatpush.msra.mxu0 0.0
  %810 = vmatpush.msra.mxu0 0.0
  %811 = vmatpush.msra.mxu0 0.0
  %812 = vmatpush.msra.mxu0 0.0
  %813 = vmatpush.msra.mxu0 %v788
  %814 = vmatpush.msra.mxu0 %v787
  %815 = vmatmul.f32.gmra.mxu0 %v797
  %v816 = vpop.f32.mrf.mxu0
  %v817 = vadd.f32 0.0, %v816
  %818 = vdwg.mxu0
  %v819 = vld [vmem:[%s37] sm:$0x1]
  %v821 = vperm.slane %v819, 0
  %822 = vrot.lane.b32.xlu0 %v821, 32
  %v823 = vpop.permute.xlu0 %822
  %v825 = vadd.f32 %v817, %v823
  %v827 = vrot.slane %v825, 4
  %v829 = vmax.f32 %v825, 0.0
  %v830 = vmax.f32 %v827, 0.0
  %831 = vrot.lane.b32.xlu0 %v782, 112
  %v832 = vpop.permute.xlu0 %831
  %833 = vrot.lane.b32.xlu0 %v784, 112
  %v834 = vpop.permute.xlu0 %833
  %v837 = vadd.f32 %v829, %v832
  %v838 = vadd.f32 %v830, %v834
  %v839 = vmax.f32 %v837, 0.0
  %v840 = vmax.f32 %v838, 0.0
  %vm841 = vcmask 388352
  %v842 = vsel %vm841, %v839, 0.0
  %v843 = vrot.slane %v842, 4
  %v844 = vadd.f32 %v842, %v843
  %v845 = vrot.slane %v844, 2
  %v846 = vadd.f32 %v844, %v845
  %v847 = vrot.slane %v846, 1
  %v848 = vadd.f32 %v846, %v847
  %v849 = vsel %vm841, %v840, 0.0
  %v850 = vrot.slane %v849, 4
  %v851 = vadd.f32 %v849, %v850
  %v852 = vrot.slane %v851, 2
  %v853 = vadd.f32 %v851, %v852
  %v854 = vrot.slane %v853, 1
  %v855 = vadd.f32 %v853, %v854
  %v856 = vrcp.pop 4.0
  %v857 = vmul.f32 4.0, %v856
  %v858 = vsub.f32 1.0, %v857
  %v859 = vmul.f32 %v856, %v858
  %v860 = vadd.f32 %v856, %v859
  %vm861 = vweird.f32 %v856
  %v862 = vsel %vm861, %v856, %v860
  %v863 = vmul.f32 %v848, %v862
  %v864 = vmul.f32 %v855, %v862
  %vm867 = vcmask 1041409
  %v868 = vsel %vm867, %v442, %v441
  %869 = vrot.lane.b32.xlu0 %v868, 112
  %v870 = vpop.permute.xlu0 %869
  %v874 = vsel %vm867, %v700, %v699
  %875 = vrot.lane.b32.xlu0 %v874, 120
  %v876 = vpop.permute.xlu0 %875
  %v880 = vsel %vm867, %v864, %v863
  %881 = vrot.lane.b32.xlu0 %v880, 112
  %v882 = vpop.permute.xlu0 %881
  %v884 = vsel %vm271, %v870, %v876
  %v885 = vsel %vm711, %v884, %v882
  %v886 = vld [vmem:[%s1] sm:$0x3]
  %v887 = vld [vmem:[%s39] sm:$0xff]
  %v888 = vld [vmem:[%s41] sm:$0x1]
  %v890 = vperm.slane %v888, 0
  %v893 = vsel %vm271, %v886, 0
  %895 = vmatpush.msra.mxu0 0.0
  %896 = vmatpush.msra.mxu0 0.0
  %897 = vmatpush.msra.mxu0 0.0
  %898 = vmatpush.msra.mxu0 0.0
  %899 = vmatpush.msra.mxu0 0.0
  %900 = vmatpush.msra.mxu0 0.0
  %901 = vmatpush.msra.mxu0 0.0
  %902 = vmatpush.msra.mxu0 0.0
  %903 = vmatpush.msra.mxu0 0.0
  %904 = vmatpush.msra.mxu0 0.0
  %905 = vmatpush.msra.mxu0 0.0
  %906 = vmatpush.msra.mxu0 0.0
  %907 = vmatpush.msra.mxu0 0.0
  %908 = vmatpush.msra.mxu0 0.0
  %909 = vmatpush.msra.mxu0 0.0
  %910 = vmatpush.msra.mxu0 %v887
  %911 = vmatmul.f32.gmra.mxu0 %v893
  %v912 = vpop.f32.mrf.mxu0
  %v913 = vadd.f32 %v890, %v912
  %914 = vdwg.mxu0
  %916 = vrot.lane.b32.xlu0 %v913, 32
  %v917 = vpop.permute.xlu0 %916
  %v919 = vsel %vm463, %v885, %v917
  %v920 = vld [vmem:[%s43] sm:$0xff]
  %v921 = vld [vmem:[%s43 + $0x8] sm:$0xff]
  %v922 = vld [vmem:[%s43 + $0x10] sm:$0xff]
  %v923 = vld [vmem:[%s43 + $0x18] sm:$0xff]
  %v924 = vld [vmem:[%s43 + $0x20] sm:$0xff]
  %v925 = vld [vmem:[%s43 + $0x28] sm:$0xff]
  %v926 = vld [vmem:[%s45] sm:$0x1]
  %v928 = vperm.slane %v926, 0
  %vm930 = vcmask 392192
  %v932 = vsel %vm930, %v919, 0
  %934 = vmatpush.msra.mxu0 0.0
  %935 = vmatpush.msra.mxu0 0.0
  %936 = vmatpush.msra.mxu0 0.0
  %937 = vmatpush.msra.mxu0 0.0
  %938 = vmatpush.msra.mxu0 0.0
  %939 = vmatpush.msra.mxu0 0.0
  %940 = vmatpush.msra.mxu0 0.0
  %941 = vmatpush.msra.mxu0 0.0
  %942 = vmatpush.msra.mxu0 0.0
  %943 = vmatpush.msra.mxu0 0.0
  %944 = vmatpush.msra.mxu0 %v925
  %945 = vmatpush.msra.mxu0 %v924
  %946 = vmatpush.msra.mxu0 %v923
  %947 = vmatpush.msra.mxu0 %v922
  %948 = vmatpush.msra.mxu0 %v921
  %949 = vmatpush.msra.mxu0 %v920
  %950 = vmatmul.f32.gmra.mxu0 %v932
  %v951 = vpop.f32.mrf.mxu0
  %v952 = vadd.f32 %v928, %v951
  %953 = vdwg.mxu0
  %v954 = vmax.f32 %v952, 0.0
  %v955 = vld [vmem:[%s47] sm:$0xff]
  %v956 = vld [vmem:[%s47 + $0x8] sm:$0xff]
  %v957 = vld [vmem:[%s47 + $0x10] sm:$0xff]
  %v958 = vld [vmem:[%s47 + $0x18] sm:$0xff]
  %v959 = vld [vmem:[%s49] sm:$0x1]
  %v961 = vperm.slane %v959, 0
  %v964 = vsel %vm463, %v954, 0
  %966 = vmatpush.msra.mxu0 0.0
  %967 = vmatpush.msra.mxu0 0.0
  %968 = vmatpush.msra.mxu0 0.0
  %969 = vmatpush.msra.mxu0 0.0
  %970 = vmatpush.msra.mxu0 0.0
  %971 = vmatpush.msra.mxu0 0.0
  %972 = vmatpush.msra.mxu0 0.0
  %973 = vmatpush.msra.mxu0 0.0
  %974 = vmatpush.msra.mxu0 0.0
  %975 = vmatpush.msra.mxu0 0.0
  %976 = vmatpush.msra.mxu0 0.0
  %977 = vmatpush.msra.mxu0 0.0
  %978 = vmatpush.msra.mxu0 %v958
  %979 = vmatpush.msra.mxu0 %v957
  %980 = vmatpush.msra.mxu0 %v956
  %981 = vmatpush.msra.mxu0 %v955
  %982 = vmatmul.f32.gmra.mxu0 %v964
  %v983 = vpop.f32.mrf.mxu0
  %v984 = vadd.f32 %v961, %v983
  %985 = vdwg.mxu0
  %v986 = vld [vmem:[%s5] sm:$0x3]
  %988 = vrot.lane.b32.xlu0 %v986, 32
  %v989 = vpop.permute.xlu0 %988
  %v991 = vsel %vm463, %v984, %v989
  %v992 = vld [vmem:[%s51] sm:$0xff]
  %v993 = vld [vmem:[%s51 + $0x8] sm:$0xff]
  %v994 = vld [vmem:[%s51 + $0x10] sm:$0xff]
  %v995 = vld [vmem:[%s51 + $0x18] sm:$0xff]
  %v996 = vld [vmem:[%s51 + $0x20] sm:$0xff]
  %v997 = vld [vmem:[%s53] sm:$0x1]
  %v999 = vperm.slane %v997, 0
  %vm1001 = vcmask 326656
  %v1003 = vsel %vm1001, %v991, 0
  %1005 = vmatpush.msra.mxu0 0.0
  %1006 = vmatpush.msra.mxu0 0.0
  %1007 = vmatpush.msra.mxu0 0.0
  %1008 = vmatpush.msra.mxu0 0.0
  %1009 = vmatpush.msra.mxu0 0.0
  %1010 = vmatpush.msra.mxu0 0.0
  %1011 = vmatpush.msra.mxu0 0.0
  %1012 = vmatpush.msra.mxu0 0.0
  %1013 = vmatpush.msra.mxu0 0.0
  %1014 = vmatpush.msra.mxu0 0.0
  %1015 = vmatpush.msra.mxu0 0.0
  %1016 = vmatpush.msra.mxu0 %v996
  %1017 = vmatpush.msra.mxu0 %v995
  %1018 = vmatpush.msra.mxu0 %v994
  %1019 = vmatpush.msra.mxu0 %v993
  %1020 = vmatpush.msra.mxu0 %v992
  %1021 = vmatmul.f32.gmra.mxu0 %v1003
  %v1022 = vpop.f32.mrf.mxu0
  %v1023 = vadd.f32 %v999, %v1022
  %1024 = vdwg.mxu0
  %vm1025 = vcmp.ge.f32.partialorder %v1023, 0.0
  %v1026 = vmul.f32 %v1023, 0.2
  %v1027 = vsel %vm1025, %v1023, %v1026
  %v1028 = vld [vmem:[%s55] sm:$0xff]
  %v1029 = vld [vmem:[%s55 + $0x8] sm:$0xff]
  %v1030 = vld [vmem:[%s55 + $0x10] sm:$0xff]
  %v1031 = vld [vmem:[%s55 + $0x18] sm:$0xff]
  %v1032 = vld [vmem:[%s57] sm:$0x1]
  %v1034 = vperm.slane %v1032, 0
  %v1037 = vsel %vm463, %v1027, 0
  %1039 = vmatpush.msra.mxu0 0.0
  %1040 = vmatpush.msra.mxu0 0.0
  %1041 = vmatpush.msra.mxu0 0.0
  %1042 = vmatpush.msra.mxu0 0.0
  %1043 = vmatpush.msra.mxu0 0.0
  %1044 = vmatpush.msra.mxu0 0.0
  %1045 = vmatpush.msra.mxu0 0.0
  %1046 = vmatpush.msra.mxu0 0.0
  %1047 = vmatpush.msra.mxu0 0.0
  %1048 = vmatpush.msra.mxu0 0.0
  %1049 = vmatpush.msra.mxu0 0.0
  %1050 = vmatpush.msra.mxu0 0.0
  %1051 = vmatpush.msra.mxu0 %v1031
  %1052 = vmatpush.msra.mxu0 %v1030
  %1053 = vmatpush.msra.mxu0 %v1029
  %1054 = vmatpush.msra.mxu0 %v1028
  %1055 = vmatmul.f32.gmra.mxu0 %v1037
  %v1056 = vpop.f32.mrf.mxu0
  %v1057 = vadd.f32 %v1034, %v1056
  %1058 = vdwg.mxu0
  %vm1059 = vcmp.ge.f32.partialorder %v1057, 0.0
  %v1060 = vmul.f32 %v1057, 0.2
  %v1061 = vsel %vm1059, %v1057, %v1060
  %v1062 = vld [vmem:[%s59] sm:$0xff]
  %v1063 = vld [vmem:[%s59 + $0x8] sm:$0xff]
  %v1064 = vld [vmem:[#allocation2] sm:$0x1]
  %v1066 = vperm.slane %v1064, 0
  %v1069 = vsel %vm711, %v1061, 0
  %1071 = vmatpush.msra.mxu0 0.0
  %1072 = vmatpush.msra.mxu0 0.0
  %1073 = vmatpush.msra.mxu0 0.0
  %1074 = vmatpush.msra.mxu0 0.0
  %1075 = vmatpush.msra.mxu0 0.0
  %1076 = vmatpush.msra.mxu0 0.0
  %1077 = vmatpush.msra.mxu0 0.0
  %1078 = vmatpush.msra.mxu0 0.0
  %1079 = vmatpush.msra.mxu0 0.0
  %1080 = vmatpush.msra.mxu0 0.0
  %1081 = vmatpush.msra.mxu0 0.0
  %1082 = vmatpush.msra.mxu0 0.0
  %1083 = vmatpush.msra.mxu0 0.0
  %1084 = vmatpush.msra.mxu0 0.0
  %1085 = vmatpush.msra.mxu0 %v1063
  %1086 = vmatpush.msra.mxu0 %v1062
  %1087 = vmatmul.f32.gmra.mxu0 %v1069
  %v1088 = vpop.f32.mrf.mxu0
  %v1089 = vadd.f32 %v1066, %v1088
  %1090 = vdwg.mxu0
  %vm1091 = vcmp.ge.f32.partialorder %v1089, 0.0
  %v1092 = vmul.f32 %v1089, 0.2
  %v1093 = vsel %vm1091, %v1089, %v1092
  %v1094 = vsel %vm178, %v1093, 0.0
  %1096 = vset.pattern.permute.xlu0 0
  %1097 = vperm.xlu0 %1096, %v1094
  %v1098 = vpop.permute.xlu0 %1097
  %1100 = vst [vmem:[%s63] sm:$0xff] %v1098
  // Predicated region
  $region126: #{_lambda_.1} parent=0 // pred_check
    _
  $region127: #{_lambda_.1} parent=0 // pred_check_branch
    %1102 = sbr.rel (0) target = $region129
  $region128: #{_lambda_.1} parent=0 // pred_region
    _
  $region129: #{_lambda_.1} parent=0 // pred_fallthru
    _
  // Predicated region
  $region130: #{_lambda_.1} parent=0 // pred_check
    _
  $region131: #{_lambda_.1} parent=0 // pred_check_branch
    %1104 = sbr.rel (0) target = $region133
  $region132: #{_lambda_.1} parent=0 // pred_region
    _
  $region133: #{_lambda_.1} parent=0 // pred_fallthru
    _

</llo_original>
